<compile_context>
chip_gen: v5e
topology: v5e:2x2
jax: 0.10.0
libtpu: 0.0.40
codegen_flags: <defaults>
</compile_context>

<pallas_src>
import functools

import jax
import jax.numpy as jnp
from jax.experimental import pallas as pl
from jax.experimental.pallas import tpu as pltpu


def _round_up(v, m):
    return ((v + m - 1) // m) * m


def _vmem_limit_bytes():
    """Per-generation VMEM budget: capacity minus headroom, capped at 100 MiB."""
    cap = 64 * 1024 * 1024  # conservative default (v7x per-TC VMEM)
    try:
        cap = int(getattr(pltpu.get_tpu_info(), "vmem_capacity_bytes", cap))
    except Exception:  # older jax / no device info: keep conservative default
        pass
    return max(32 * 1024 * 1024,
               min(cap - 8 * 1024 * 1024, 100 * 1024 * 1024))


def _ffn_kernel_resident(x_ref, w1_ref, w2_ref, b1_ref, b2_ref, w3_ref, b3_ref,
                         o_ref, *, gate_dtype):
    """Weights fully resident in VMEM; one M tile per grid step."""
    x = x_ref[...]                                   # (bm, E), input dtype
    x_bf = x.astype(jnp.bfloat16)                    # MXU inputs in bf16

    # Two dots (gate / value halves) instead of one (bm, 2H) dot + slice.
    x1 = jnp.dot(x_bf, w1_ref[...], preferred_element_type=jnp.float32)
    x2 = jnp.dot(x_bf, w2_ref[...], preferred_element_type=jnp.float32)
    x1 = (x1 + b1_ref[...]).astype(gate_dtype)       # f32 bias add, then gate dtype
    x2 = (x2 + b2_ref[...]).astype(gate_dtype)

    # SiLU gate (sigmoid -> EUP, muls -> VPU); bf16 on v6e/v7x, f32 on v5e.
    hidden = (x1 * jax.nn.sigmoid(x1)) * x2          # (bm, H)

    out = jnp.dot(hidden.astype(jnp.bfloat16), w3_ref[...],
                  preferred_element_type=jnp.float32)
    out = out + b3_ref[...]

    # Residual add in f32; single lane-dense store per tile.
    o_ref[...] = (x.astype(jnp.float32) + out).astype(o_ref.dtype)


def _ffn_kernel_streamed(x_ref, w1_ref, w2_ref, b1_ref, b2_ref, w3_ref, b3_ref,
                         o_ref, acc_ref, *, gate_dtype):
    """Weights streamed over an 'arbitrary' H axis with a VMEM f32 accumulator."""
    h = pl.program_id(1)

    @pl.when(h == 0)
    def _():
        acc_ref[...] = jnp.zeros_like(acc_ref)

    x = x_ref[...]
    x_bf = x.astype(jnp.bfloat16)
    x1 = jnp.dot(x_bf, w1_ref[...], preferred_element_type=jnp.float32)
    x2 = jnp.dot(x_bf, w2_ref[...], preferred_element_type=jnp.float32)
    x1 = (x1 + b1_ref[...]).astype(gate_dtype)
    x2 = (x2 + b2_ref[...]).astype(gate_dtype)
    hidden = (x1 * jax.nn.sigmoid(x1)) * x2
    acc_ref[...] += jnp.dot(hidden.astype(jnp.bfloat16), w3_ref[...],
                            preferred_element_type=jnp.float32)

    @pl.when(h == pl.num_programs(1) - 1)
    def _():
        o_ref[...] = (x.astype(jnp.float32) + acc_ref[...]
                      + b3_ref[...]).astype(o_ref.dtype)


def swiglu_ffn(x, w12_t, b12, w3_t, b3, *, block_m=256,
               gate_dtype=jnp.bfloat16, single_buffer_weights=True,
               force_stream_h=False):
    """x: (B, N, E).  w12_t: (E, 2H), b12: (2H,), w3_t: (H, E), b3: (E,).

    gate_dtype: jnp.bfloat16 on v6e/v7x (bf16 VPU/EUP), jnp.float32 on v5e.
    Activations may be f32 or bf16 (bf16 halves per-tile HBM traffic).
    Real model dims (E, H) are 128-multiples; tiny demo dims still work since
    the weight/bias blocks then equal the full array extents.
    """
    B, N, E = x.shape
    H = w12_t.shape[1] // 2
    M = B * N
    x2d = x.reshape(M, E)

    # Split fused w12 into gate/value halves; bf16 weights for the MXU.
    # (In a real model, pre-split / pre-cast these once outside the step fn.)
    w1_t = w12_t[:, :H].astype(jnp.bfloat16)          # (E, H)
    w2_t = w12_t[:, H:].astype(jnp.bfloat16)          # (E, H)
    w3_bf = w3_t.astype(jnp.bfloat16)                 # (H, E)
    b1_2d = b12[:H].reshape(1, H).astype(jnp.float32)
    b2_2d = b12[H:].reshape(1, H).astype(jnp.float32)
    b3_2d = b3.reshape(1, E).astype(jnp.float32)

    vmem_limit = _vmem_limit_bytes()

    # Row tile: round to the activation dtype's sublane packing and keep at
    # least two M tiles so v7x's second TensorCore gets work on the
    # "parallel" axis (harmless on 1-TC v5e/v6e).
    pack = {4: 8, 2: 16, 1: 32}.get(x.dtype.itemsize, 8)
    bm = min(block_m, _round_up(M, pack))
    if pl.cdiv(M, bm) < 2 and M > pack:
        bm = _round_up(pl.cdiv(M, 2), pack)

    # Residency check: bf16 weights (single-buffered) + x/out tiles (double-
    # buffered) + ~3 bf16 (bm, H) gate intermediates must fit the budget.
    weight_bytes = 3 * E * H * 2                      # W1 + W2 + W3 in bf16
    act_bytes = bm * (4 * E * max(x.dtype.itemsize, 4) + 3 * H * 2)
    stream_h = force_stream_h or (weight_bytes + act_bytes > 0.8 * vmem_limit)

    cost = pl.CostEstimate(
        flops=int(6 * M * E * H),                     # 2*M*E*2H + 2*M*H*E
        transcendentals=int(M * H),                   # sigmoid in the gate
        bytes_accessed=int(x2d.size * x2d.dtype.itemsize
                           + weight_bytes + 4 * (2 * H + E)
                           + M * E * x.dtype.itemsize),
    )

    if not stream_h:
        def cspec(shape):
            # Grid-invariant operand: fetched once; single-buffered to halve
            # its VMEM footprint.
            if single_buffer_weights:
                return pl.BlockSpec(shape, lambda i: (0, 0),
                                    pipeline_mode=pl.Buffered(1))
            return pl.BlockSpec(shape, lambda i: (0, 0))

        out2d = pl.pallas_call(
            functools.partial(_ffn_kernel_resident, gate_dtype=gate_dtype),
            out_shape=jax.ShapeDtypeStruct((M, E), x.dtype),
            grid_spec=pltpu.PrefetchScalarGridSpec(
                num_scalar_prefetch=0,
                grid=(pl.cdiv(M, bm),),
                in_specs=[
                    pl.BlockSpec((bm, E), lambda i: (i, 0)),   # x rows
                    cspec((E, H)), cspec((E, H)),              # W1^T, W2^T
                    cspec((1, H)), cspec((1, H)),              # b1, b2
                    cspec((H, E)), cspec((1, E)),              # W3^T, b3
                ],
                out_specs=pl.BlockSpec((bm, E), lambda i: (i, 0)),
            ),
            compiler_params=pltpu.CompilerParams(
                dimension_semantics=("parallel",),
                vmem_limit_bytes=vmem_limit),
            cost_estimate=cost,
        )(x2d, w1_t, w2_t, b1_2d, b2_2d, w3_bf, b3_2d)
    else:
        # Weights cannot stay resident: stream H tiles (reduction axis last),
        # accumulate the second matmul into a (bm, E) f32 VMEM scratch, and
        # enlarge the M tile so each streamed weight tile is amortised.
        bm = min(max(block_m, 512), _round_up(M, pack))
        if pl.cdiv(M, bm) < 2 and M > pack:
            bm = _round_up(pl.cdiv(M, 2), pack)
        block_h = H                                    # fallback: single tile
        for cand in (512, 256, 128):                   # must divide H exactly
            if H % cand == 0:
                block_h = cand
                break

        def cspec2(shape):
            if single_buffer_weights:
                return pl.BlockSpec(shape, lambda i, h: (0, 0),
                                    pipeline_mode=pl.Buffered(1))
            return pl.BlockSpec(shape, lambda i, h: (0, 0))

        out2d = pl.pallas_call(
            functools.partial(_ffn_kernel_streamed, gate_dtype=gate_dtype),
            out_shape=jax.ShapeDtypeStruct((M, E), x.dtype),
            grid_spec=pltpu.PrefetchScalarGridSpec(
                num_scalar_prefetch=0,
                grid=(pl.cdiv(M, bm), H // block_h),
                in_specs=[
                    pl.BlockSpec((bm, E), lambda i, h: (i, 0)),       # x rows
                    pl.BlockSpec((E, block_h), lambda i, h: (0, h)),  # W1^T cols
                    pl.BlockSpec((E, block_h), lambda i, h: (0, h)),  # W2^T cols
                    pl.BlockSpec((1, block_h), lambda i, h: (0, h)),  # b1 tile
                    pl.BlockSpec((1, block_h), lambda i, h: (0, h)),  # b2 tile
                    pl.BlockSpec((block_h, E), lambda i, h: (h, 0)),  # W3^T rows
                    cspec2((1, E)),                                   # b3
                ],
                out_specs=pl.BlockSpec((bm, E), lambda i, h: (i, 0)),
                scratch_shapes=[pltpu.VMEM((bm, E), jnp.float32)],
            ),
            compiler_params=pltpu.CompilerParams(
                dimension_semantics=("parallel", "arbitrary"),
                vmem_limit_bytes=vmem_limit),
            cost_estimate=cost,
        )(x2d, w1_t, w2_t, b1_2d, b2_2d, w3_bf, b3_2d)

    return out2d.reshape(B, N, E)


def reference_swiglu_ffn(x, w12_t, b12, w3_t, b3):
    x12 = jnp.einsum("bne,eh->bnh", x, w12_t) + b12
    h = x12.shape[-1] // 2
    x1, x2 = x12[..., :h], x12[..., h:]
    hidden = jax.nn.silu(x1) * x2
    out = jnp.einsum("bnh,he->bne", hidden, w3_t) + b3
    return x + out


if __name__ == "__main__":
    def make_inputs(key, B, N, E, H):
        kx, kw12, kb12, kw3, kb3 = jax.random.split(key, 5)
        x = jax.random.normal(kx, (B, N, E), jnp.float32)
        # nn.Linear(E, 2H).weight is (2H, E); pass transposed (E, 2H).
        w12 = jax.random.normal(kw12, (2 * H, E), jnp.float32) * 0.05
        b12 = jax.random.normal(kb12, (2 * H,), jnp.float32) * 0.05
        # nn.Linear(H, E).weight is (E, H); pass transposed (H, E).
        w3 = jax.random.normal(kw3, (E, H), jnp.float32) * 0.05
        b3 = jax.random.normal(kb3, (E,), jnp.float32) * 0.05
        return x, w12.T, b12, w3.T, b3

    single_buffer = True

    def run(args, **kw):
        fn = jax.jit(functools.partial(
            swiglu_ffn, single_buffer_weights=single_buffer, **kw))
        return jax.block_until_ready(fn(*args))

    def check(out, args, tag):
        ref = reference_swiglu_ffn(*args)
        assert out.shape == ref.shape, tag
        err = jnp.max(jnp.abs(out - ref))
        # bf16 MXU inputs / bf16 gate with f32 accumulation -> loose tolerance.
        assert jnp.allclose(out, ref, atol=2e-2, rtol=2e-2), (
            f"{tag}: mismatch vs reference, max abs err = {err}")

    k1, k2 = jax.random.split(jax.random.PRNGKey(0))

    # 1) Resident-weight path; M=18 -> two 16-row tiles, ragged last tile.
    args1 = make_inputs(k1, B=2, N=9, E=32, H=32)
    try:
        out1 = run(args1)
    except Exception:
        # Compatibility fallback: retry with default double-buffered weights
        # if this JAX build rejects pipeline_mode=pl.Buffered(1).
        single_buffer = False
        out1 = run(args1)
    check(out1, args1, "resident/bf16-gate")

    # v5e-style f32 gate on the same inputs (no bf16 VPU/EUP on v5e).
    check(run(args1, gate_dtype=jnp.float32), args1, "resident/f32-gate")

    # 2) Streamed-H path (forced): accumulator over 2 H tiles + ragged M tile.
    args2 = make_inputs(k2, B=2, N=26, E=128, H=1024)
    check(run(args2, force_stream_h=True), args2, "streamed-H")

    print("KERNEL_OK")
</pallas_src>

<mosaic_0001>
module attributes {stable_mosaic.version = 11 : i64} {
  func.func @_ffn_kernel_resident(%arg0: i32, %arg1: memref<16x32xf32, #tpu.memory_space<vmem>>, %arg2: memref<32x32xbf16, #tpu.memory_space<vmem>>, %arg3: memref<32x32xbf16, #tpu.memory_space<vmem>>, %arg4: memref<1x32xf32, #tpu.memory_space<vmem>>, %arg5: memref<1x32xf32, #tpu.memory_space<vmem>>, %arg6: memref<32x32xbf16, #tpu.memory_space<vmem>>, %arg7: memref<1x32xf32, #tpu.memory_space<vmem>>, %arg8: memref<16x32xf32, #tpu.memory_space<vmem>>) attributes {dimension_semantics = [#tpu.dimension_semantics<parallel>], iteration_bounds = array<i64: 2>, scalar_prefetch = 0 : i64, scratch_operands = 0 : i64, tpu.core_type = #tpu.core_type<tc>, window_params = [{transform_indices = @transform_0, window_bounds = array<i64: 16, 32>}, {pipeline_mode = #tpu.pipeline_mode<synchronous>, transform_indices = @transform_1, window_bounds = array<i64: 32, 32>}, {pipeline_mode = #tpu.pipeline_mode<synchronous>, transform_indices = @transform_2, window_bounds = array<i64: 32, 32>}, {pipeline_mode = #tpu.pipeline_mode<synchronous>, transform_indices = @transform_3, window_bounds = array<i64: 1, 32>}, {pipeline_mode = #tpu.pipeline_mode<synchronous>, transform_indices = @transform_4, window_bounds = array<i64: 1, 32>}, {pipeline_mode = #tpu.pipeline_mode<synchronous>, transform_indices = @transform_5, window_bounds = array<i64: 32, 32>}, {pipeline_mode = #tpu.pipeline_mode<synchronous>, transform_indices = @transform_6, window_bounds = array<i64: 1, 32>}, {transform_indices = @transform_7, window_bounds = array<i64: 16, 32>}]} {
    %c0 = arith.constant 0 : index
    %c0_0 = arith.constant 0 : index
    %0 = vector.load %arg1[%c0, %c0_0] : memref<16x32xf32, #tpu.memory_space<vmem>>, vector<16x32xf32>
    %1 = arith.truncf %0 : vector<16x32xf32> to vector<16x32xbf16>
    %c0_1 = arith.constant 0 : index
    %c0_2 = arith.constant 0 : index
    %2 = vector.load %arg2[%c0_1, %c0_2] : memref<32x32xbf16, #tpu.memory_space<vmem>>, vector<32x32xbf16>
    %cst = arith.constant dense<0.000000e+00> : vector<16x32xf32>
    %3 = tpu.matmul %1, %2, %cst {dimension_numbers = #tpu.dot_dimension_numbers<[1], [0], [0], [1], [0, 0, 1, 1], [], []>} : vector<16x32xbf16>, vector<32x32xbf16>, vector<16x32xf32> -> vector<16x32xf32>
    %c0_3 = arith.constant 0 : index
    %c0_4 = arith.constant 0 : index
    %4 = vector.load %arg3[%c0_3, %c0_4] : memref<32x32xbf16, #tpu.memory_space<vmem>>, vector<32x32xbf16>
    %cst_5 = arith.constant dense<0.000000e+00> : vector<16x32xf32>
    %5 = tpu.matmul %1, %4, %cst_5 {dimension_numbers = #tpu.dot_dimension_numbers<[1], [0], [0], [1], [0, 0, 1, 1], [], []>} : vector<16x32xbf16>, vector<32x32xbf16>, vector<16x32xf32> -> vector<16x32xf32>
    %c0_6 = arith.constant 0 : index
    %c0_7 = arith.constant 0 : index
    %6 = vector.load %arg4[%c0_6, %c0_7] : memref<1x32xf32, #tpu.memory_space<vmem>>, vector<1x32xf32>
    %7 = vector.broadcast %6 : vector<1x32xf32> to vector<16x32xf32>
    %8 = arith.addf %3, %7 : vector<16x32xf32>
    %9 = arith.truncf %8 : vector<16x32xf32> to vector<16x32xbf16>
    %c0_8 = arith.constant 0 : index
    %c0_9 = arith.constant 0 : index
    %10 = vector.load %arg5[%c0_8, %c0_9] : memref<1x32xf32, #tpu.memory_space<vmem>>, vector<1x32xf32>
    %11 = vector.broadcast %10 : vector<1x32xf32> to vector<16x32xf32>
    %12 = arith.addf %5, %11 : vector<16x32xf32>
    %13 = arith.truncf %12 : vector<16x32xf32> to vector<16x32xbf16>
    %14 = arith.negf %9 : vector<16x32xbf16>
    %15 = math.exp %14 : vector<16x32xbf16>
    %cst_10 = arith.constant 1.000000e+00 : bf16
    %16 = vector.broadcast %cst_10 : bf16 to vector<16x32xbf16>
    %17 = arith.addf %16, %15 : vector<16x32xbf16>
    %18 = arith.divf %16, %17 : vector<16x32xbf16>
    %19 = arith.mulf %9, %18 : vector<16x32xbf16>
    %20 = arith.mulf %19, %13 : vector<16x32xbf16>
    %c0_11 = arith.constant 0 : index
    %c0_12 = arith.constant 0 : index
    %21 = vector.load %arg6[%c0_11, %c0_12] : memref<32x32xbf16, #tpu.memory_space<vmem>>, vector<32x32xbf16>
    %cst_13 = arith.constant dense<0.000000e+00> : vector<16x32xf32>
    %22 = tpu.matmul %20, %21, %cst_13 {dimension_numbers = #tpu.dot_dimension_numbers<[1], [0], [0], [1], [0, 0, 1, 1], [], []>} : vector<16x32xbf16>, vector<32x32xbf16>, vector<16x32xf32> -> vector<16x32xf32>
    %c0_14 = arith.constant 0 : index
    %c0_15 = arith.constant 0 : index
    %23 = vector.load %arg7[%c0_14, %c0_15] : memref<1x32xf32, #tpu.memory_space<vmem>>, vector<1x32xf32>
    %24 = vector.broadcast %23 : vector<1x32xf32> to vector<16x32xf32>
    %25 = arith.addf %22, %24 : vector<16x32xf32>
    %26 = arith.addf %0, %25 : vector<16x32xf32>
    %c0_16 = arith.constant 0 : index
    %c0_17 = arith.constant 0 : index
    %27 = vector.load %arg8[%c0_16, %c0_17] : memref<16x32xf32, #tpu.memory_space<vmem>>, vector<16x32xf32>
    tpu.vector_store %arg8[%c0_16, %c0_17], %26 {strides = array<i32>} : memref<16x32xf32, #tpu.memory_space<vmem>>, vector<16x32xf32>,
    return
  }
  func.func @transform_0(%arg0: i32) -> (i32, i32) {
    %c0_i32 = arith.constant 0 : i32
    %c0_i32_0 = arith.constant 0 : i32
    return %arg0, %c0_i32 : i32, i32
  }
  func.func @transform_1(%arg0: i32) -> (i32, i32) {
    %c0_i32 = arith.constant 0 : i32
    %c0_i32_0 = arith.constant 0 : i32
    %c0_i32_1 = arith.constant 0 : i32
    return %c0_i32, %c0_i32_0 : i32, i32
  }
  func.func @transform_2(%arg0: i32) -> (i32, i32) {
    %c0_i32 = arith.constant 0 : i32
    %c0_i32_0 = arith.constant 0 : i32
    %c0_i32_1 = arith.constant 0 : i32
    return %c0_i32, %c0_i32_0 : i32, i32
  }
  func.func @transform_3(%arg0: i32) -> (i32, i32) {
    %c0_i32 = arith.constant 0 : i32
    %c0_i32_0 = arith.constant 0 : i32
    %c0_i32_1 = arith.constant 0 : i32
    return %c0_i32, %c0_i32_0 : i32, i32
  }
  func.func @transform_4(%arg0: i32) -> (i32, i32) {
    %c0_i32 = arith.constant 0 : i32
    %c0_i32_0 = arith.constant 0 : i32
    %c0_i32_1 = arith.constant 0 : i32
    return %c0_i32, %c0_i32_0 : i32, i32
  }
  func.func @transform_5(%arg0: i32) -> (i32, i32) {
    %c0_i32 = arith.constant 0 : i32
    %c0_i32_0 = arith.constant 0 : i32
    %c0_i32_1 = arith.constant 0 : i32
    return %c0_i32, %c0_i32_0 : i32, i32
  }
  func.func @transform_6(%arg0: i32) -> (i32, i32) {
    %c0_i32 = arith.constant 0 : i32
    %c0_i32_0 = arith.constant 0 : i32
    %c0_i32_1 = arith.constant 0 : i32
    return %c0_i32, %c0_i32_0 : i32, i32
  }
  func.func @transform_7(%arg0: i32) -> (i32, i32) {
    %c0_i32 = arith.constant 0 : i32
    %c0_i32_0 = arith.constant 0 : i32
    return %arg0, %c0_i32 : i32, i32
  }
}

module attributes {stable_mosaic.version = 11 : i64} {
  func.func @_ffn_kernel_resident(%arg0: i32, %arg1: memref<16x32xf32, #tpu.memory_space<vmem>>, %arg2: memref<32x32xbf16, #tpu.memory_space<vmem>>, %arg3: memref<32x32xbf16, #tpu.memory_space<vmem>>, %arg4: memref<1x32xf32, #tpu.memory_space<vmem>>, %arg5: memref<1x32xf32, #tpu.memory_space<vmem>>, %arg6: memref<32x32xbf16, #tpu.memory_space<vmem>>, %arg7: memref<1x32xf32, #tpu.memory_space<vmem>>, %arg8: memref<16x32xf32, #tpu.memory_space<vmem>>) attributes {dimension_semantics = [#tpu.dimension_semantics<parallel>], iteration_bounds = array<i64: 2>, scalar_prefetch = 0 : i64, scratch_operands = 0 : i64, tpu.core_type = #tpu.core_type<tc>, window_params = [{transform_indices = @transform_0, window_bounds = array<i64: 16, 32>}, {pipeline_mode = #tpu.pipeline_mode<synchronous>, transform_indices = @transform_1, window_bounds = array<i64: 32, 32>}, {pipeline_mode = #tpu.pipeline_mode<synchronous>, transform_indices = @transform_2, window_bounds = array<i64: 32, 32>}, {pipeline_mode = #tpu.pipeline_mode<synchronous>, transform_indices = @transform_3, window_bounds = array<i64: 1, 32>}, {pipeline_mode = #tpu.pipeline_mode<synchronous>, transform_indices = @transform_4, window_bounds = array<i64: 1, 32>}, {pipeline_mode = #tpu.pipeline_mode<synchronous>, transform_indices = @transform_5, window_bounds = array<i64: 32, 32>}, {pipeline_mode = #tpu.pipeline_mode<synchronous>, transform_indices = @transform_6, window_bounds = array<i64: 1, 32>}, {transform_indices = @transform_7, window_bounds = array<i64: 16, 32>}]} {
    %c0 = arith.constant 0 : index
    %c0_0 = arith.constant 0 : index
    %0 = vector.load %arg1[%c0, %c0_0] : memref<16x32xf32, #tpu.memory_space<vmem>>, vector<16x32xf32>
    %1 = arith.truncf %0 : vector<16x32xf32> to vector<16x32xbf16>
    %c0_1 = arith.constant 0 : index
    %c0_2 = arith.constant 0 : index
    %2 = vector.load %arg2[%c0_1, %c0_2] : memref<32x32xbf16, #tpu.memory_space<vmem>>, vector<32x32xbf16>
    %cst = arith.constant dense<0.000000e+00> : vector<16x32xf32>
    %3 = tpu.matmul %1, %2, %cst {dimension_numbers = #tpu.dot_dimension_numbers<[1], [0], [0], [1], [0, 0, 1, 1], [], []>} : vector<16x32xbf16>, vector<32x32xbf16>, vector<16x32xf32> -> vector<16x32xf32>
    %c0_3 = arith.constant 0 : index
    %c0_4 = arith.constant 0 : index
    %4 = vector.load %arg3[%c0_3, %c0_4] : memref<32x32xbf16, #tpu.memory_space<vmem>>, vector<32x32xbf16>
    %cst_5 = arith.constant dense<0.000000e+00> : vector<16x32xf32>
    %5 = tpu.matmul %1, %4, %cst_5 {dimension_numbers = #tpu.dot_dimension_numbers<[1], [0], [0], [1], [0, 0, 1, 1], [], []>} : vector<16x32xbf16>, vector<32x32xbf16>, vector<16x32xf32> -> vector<16x32xf32>
    %c0_6 = arith.constant 0 : index
    %c0_7 = arith.constant 0 : index
    %6 = vector.load %arg4[%c0_6, %c0_7] : memref<1x32xf32, #tpu.memory_space<vmem>>, vector<1x32xf32>
    %7 = vector.broadcast %6 : vector<1x32xf32> to vector<16x32xf32>
    %8 = arith.addf %3, %7 : vector<16x32xf32>
    %9 = arith.truncf %8 : vector<16x32xf32> to vector<16x32xbf16>
    %c0_8 = arith.constant 0 : index
    %c0_9 = arith.constant 0 : index
    %10 = vector.load %arg5[%c0_8, %c0_9] : memref<1x32xf32, #tpu.memory_space<vmem>>, vector<1x32xf32>
    %11 = vector.broadcast %10 : vector<1x32xf32> to vector<16x32xf32>
    %12 = arith.addf %5, %11 : vector<16x32xf32>
    %13 = arith.truncf %12 : vector<16x32xf32> to vector<16x32xbf16>
    %14 = arith.negf %9 : vector<16x32xbf16>
    %15 = math.exp %14 : vector<16x32xbf16>
    %cst_10 = arith.constant 1.000000e+00 : bf16
    %16 = vector.broadcast %cst_10 : bf16 to vector<16x32xbf16>
    %17 = arith.addf %16, %15 : vector<16x32xbf16>
    %18 = arith.divf %16, %17 : vector<16x32xbf16>
    %19 = arith.mulf %9, %18 : vector<16x32xbf16>
    %20 = arith.mulf %19, %13 : vector<16x32xbf16>
    %c0_11 = arith.constant 0 : index
    %c0_12 = arith.constant 0 : index
    %21 = vector.load %arg6[%c0_11, %c0_12] : memref<32x32xbf16, #tpu.memory_space<vmem>>, vector<32x32xbf16>
    %cst_13 = arith.constant dense<0.000000e+00> : vector<16x32xf32>
    %22 = tpu.matmul %20, %21, %cst_13 {dimension_numbers = #tpu.dot_dimension_numbers<[1], [0], [0], [1], [0, 0, 1, 1], [], []>} : vector<16x32xbf16>, vector<32x32xbf16>, vector<16x32xf32> -> vector<16x32xf32>
    %c0_14 = arith.constant 0 : index
    %c0_15 = arith.constant 0 : index
    %23 = vector.load %arg7[%c0_14, %c0_15] : memref<1x32xf32, #tpu.memory_space<vmem>>, vector<1x32xf32>
    %24 = vector.broadcast %23 : vector<1x32xf32> to vector<16x32xf32>
    %25 = arith.addf %22, %24 : vector<16x32xf32>
    %26 = arith.addf %0, %25 : vector<16x32xf32>
    %c0_16 = arith.constant 0 : index
    %c0_17 = arith.constant 0 : index
    %27 = vector.load %arg8[%c0_16, %c0_17] : memref<16x32xf32, #tpu.memory_space<vmem>>, vector<16x32xf32>
    tpu.vector_store %arg8[%c0_16, %c0_17], %26 {strides = array<i32>} : memref<16x32xf32, #tpu.memory_space<vmem>>, vector<16x32xf32>,
    return
  }
  func.func @transform_0(%arg0: i32) -> (i32, i32) {
    %c0_i32 = arith.constant 0 : i32
    %c0_i32_0 = arith.constant 0 : i32
    return %arg0, %c0_i32 : i32, i32
  }
  func.func @transform_1(%arg0: i32) -> (i32, i32) {
    %c0_i32 = arith.constant 0 : i32
    %c0_i32_0 = arith.constant 0 : i32
    %c0_i32_1 = arith.constant 0 : i32
    return %c0_i32, %c0_i32_0 : i32, i32
  }
  func.func @transform_2(%arg0: i32) -> (i32, i32) {
    %c0_i32 = arith.constant 0 : i32
    %c0_i32_0 = arith.constant 0 : i32
    %c0_i32_1 = arith.constant 0 : i32
    return %c0_i32, %c0_i32_0 : i32, i32
  }
  func.func @transform_3(%arg0: i32) -> (i32, i32) {
    %c0_i32 = arith.constant 0 : i32
    %c0_i32_0 = arith.constant 0 : i32
    %c0_i32_1 = arith.constant 0 : i32
    return %c0_i32, %c0_i32_0 : i32, i32
  }
  func.func @transform_4(%arg0: i32) -> (i32, i32) {
    %c0_i32 = arith.constant 0 : i32
    %c0_i32_0 = arith.constant 0 : i32
    %c0_i32_1 = arith.constant 0 : i32
    return %c0_i32, %c0_i32_0 : i32, i32
  }
  func.func @transform_5(%arg0: i32) -> (i32, i32) {
    %c0_i32 = arith.constant 0 : i32
    %c0_i32_0 = arith.constant 0 : i32
    %c0_i32_1 = arith.constant 0 : i32
    return %c0_i32, %c0_i32_0 : i32, i32
  }
  func.func @transform_6(%arg0: i32) -> (i32, i32) {
    %c0_i32 = arith.constant 0 : i32
    %c0_i32_0 = arith.constant 0 : i32
    %c0_i32_1 = arith.constant 0 : i32
    return %c0_i32, %c0_i32_0 : i32, i32
  }
  func.func @transform_7(%arg0: i32) -> (i32, i32) {
    %c0_i32 = arith.constant 0 : i32
    %c0_i32_0 = arith.constant 0 : i32
    return %arg0, %c0_i32 : i32, i32
  }
}

</mosaic_0001>

<llo_original>
// kernel: swiglu_ffn.1
$region0: #{swiglu_ffn.1}
  #allocation0 [shape = 'u32[]', space=smem, size = 0x4, offset = 0x4, fixed_abs, tag = 'smem constant byte address 0x4 - core index']
  #allocation1 [shape = 'u32[72,128]{1,0:T(1,128)}', space=vmem, size = 0x9000, scoped, tag = 'internal scratch']
  %s0 = inlined_call_operand.vmem [shape: f32[18,32], index: 0, kind: input, shape index: {}]
  %s1 = inlined_call_operand.vmem [shape: bf16[32,32], index: 1, kind: input, shape index: {}]
  %s2 = inlined_call_operand.vmem [shape: bf16[32,32], index: 2, kind: input, shape index: {}]
  %s3 = inlined_call_operand.vmem [shape: f32[1,32], index: 3, kind: input, shape index: {}]
  %s4 = inlined_call_operand.vmem [shape: f32[1,32], index: 4, kind: input, shape index: {}]
  %s5 = inlined_call_operand.vmem [shape: bf16[32,32], index: 5, kind: input, shape index: {}]
  %s6 = inlined_call_operand.vmem [shape: f32[1,32], index: 6, kind: input, shape index: {}]
  %s7 = inlined_call_operand.vmem [shape: f32[18,32], index: 7, kind: output, shape index: {}]
  %s8 = sld [smem:[#allocation0]]
  $region109: #{swiglu_ffn.1} parent=0
    _
  %s10 = ssub.s32 1, %s8
  %s11 = scalar_select 0, %s10, %s8
  $region1: #{swiglu_ffn.1} parent=0
    #allocation2 [shape = 'u8[16384]{0}', space=vmem, size = 0x4000, scoped, tag = 'output window, operand 0']
    loop: start=0, step=1, limit=4
    $region2: #{swiglu_ffn.1} parent=1 // loop_pre_header
      _
    $region3: #{swiglu_ffn.1} parent=1 // loop_header
      %s13 = sphi 0, %s17
      %p14 = scmp.ge.s32.totalorder %s13, 4
      %s23 = sphi 0, %s25
      %s26 = sphi 0, %s23
      %s27 = sphi 0, %s26
      %s43 = sphi 0, %s27
      %s47 = sphi 0, %s47
      %s49 = sphi 0, %s47
      %s50 = sphi 0, %s49
      %s64 = sphi 0, %s50
      %s68 = sphi 0, %s68
      %s70 = sphi 0, %s68
      %s71 = sphi 0, %s70
      %s85 = sphi 0, %s71
      %s89 = sphi 0, %s89
      %s91 = sphi 0, %s89
      %s92 = sphi 0, %s91
      %s106 = sphi 0, %s92
      %s110 = sphi 0, %s110
      %s112 = sphi 0, %s110
      %s113 = sphi 0, %s112
      %s127 = sphi 0, %s113
      %s131 = sphi 0, %s131
      %s133 = sphi 0, %s131
      %s134 = sphi 0, %s133
      %s148 = sphi 0, %s134
      %s152 = sphi 0, %s152
      %s154 = sphi 0, %s152
      %s155 = sphi 0, %s154
      %s169 = sphi 0, %s155
      %s175 = sphi 0, %s177
      %s178 = sphi 0, %s175
      %s179 = sphi 0, %s178
      %s195 = sphi 0, %s179
    $region4: #{swiglu_ffn.1} parent=1 // loop_header_branch
      %16 = sbr.rel (%p14) target = $region8
    $region5: #{swiglu_ffn.1} parent=1 // loop_body
      %s18 = ssub.s32 %s13, 1
      %s19 = ssub.s32 %s13, 2
      %s20 = sadd.s32 %s13, 1
      %s21 = ssub.s32 %s13, %s20
      %p22 = scmp.eq.s32.totalorder %s21, 0
      %s24 = sadd.s32 %s23, 1
      %s25 = scalar_select %p22, %s23, %s24
      %p28 = pneg %p22
      %p29 = scmp.eq.s32.totalorder %s13, 1
      %p30 = por %p28, %p29
      %p31 = scmp.ne.s32.totalorder %s23, %s26
      %p32 = scmp.eq.s32.totalorder %s13, 0
      %p33 = por %p31, %p32
      %p34 = scmp.ne.s32.totalorder %s23, %s26
      %p35 = scmp.eq.s32.totalorder %s18, 1
      %p36 = por %p34, %p35
      %p37 = scmp.ne.s32.totalorder %s26, %s27
      %p38 = scmp.eq.s32.totalorder %s18, 0
      %p39 = por %p37, %p38
      %p40 = scmp.ne.s32.totalorder %s26, %s27
      %p41 = scmp.eq.s32.totalorder %s19, 1
      %p42 = por %p40, %p41
      %p44 = scmp.ne.s32.totalorder %s27, %s43
      %p45 = scmp.eq.s32.totalorder %s19, 0
      %p46 = por %p44, %p45
      %s48 = sadd.s32 %s47, 1
      %p51 = scmp.eq.s32.totalorder %s13, 1
      %p52 = scmp.ne.s32.totalorder %s47, %s49
      %p53 = scmp.eq.s32.totalorder %s13, 0
      %p54 = por %p52, %p53
      %p55 = scmp.ne.s32.totalorder %s47, %s49
      %p56 = scmp.eq.s32.totalorder %s18, 1
      %p57 = por %p55, %p56
      %p58 = scmp.ne.s32.totalorder %s49, %s50
      %p59 = scmp.eq.s32.totalorder %s18, 0
      %p60 = por %p58, %p59
      %p61 = scmp.ne.s32.totalorder %s49, %s50
      %p62 = scmp.eq.s32.totalorder %s19, 1
      %p63 = por %p61, %p62
      %p65 = scmp.ne.s32.totalorder %s50, %s64
      %p66 = scmp.eq.s32.totalorder %s19, 0
      %p67 = por %p65, %p66
      %s69 = sadd.s32 %s68, 1
      %p72 = scmp.eq.s32.totalorder %s13, 1
      %p73 = scmp.ne.s32.totalorder %s68, %s70
      %p74 = scmp.eq.s32.totalorder %s13, 0
      %p75 = por %p73, %p74
      %p76 = scmp.ne.s32.totalorder %s68, %s70
      %p77 = scmp.eq.s32.totalorder %s18, 1
      %p78 = por %p76, %p77
      %p79 = scmp.ne.s32.totalorder %s70, %s71
      %p80 = scmp.eq.s32.totalorder %s18, 0
      %p81 = por %p79, %p80
      %p82 = scmp.ne.s32.totalorder %s70, %s71
      %p83 = scmp.eq.s32.totalorder %s19, 1
      %p84 = por %p82, %p83
      %p86 = scmp.ne.s32.totalorder %s71, %s85
      %p87 = scmp.eq.s32.totalorder %s19, 0
      %p88 = por %p86, %p87
      %s90 = sadd.s32 %s89, 1
      %p93 = scmp.eq.s32.totalorder %s13, 1
      %p94 = scmp.ne.s32.totalorder %s89, %s91
      %p95 = scmp.eq.s32.totalorder %s13, 0
      %p96 = por %p94, %p95
      %p97 = scmp.ne.s32.totalorder %s89, %s91
      %p98 = scmp.eq.s32.totalorder %s18, 1
      %p99 = por %p97, %p98
      %p100 = scmp.ne.s32.totalorder %s91, %s92
      %p101 = scmp.eq.s32.totalorder %s18, 0
      %p102 = por %p100, %p101
      %p103 = scmp.ne.s32.totalorder %s91, %s92
      %p104 = scmp.eq.s32.totalorder %s19, 1
      %p105 = por %p103, %p104
      %p107 = scmp.ne.s32.totalorder %s92, %s106
      %p108 = scmp.eq.s32.totalorder %s19, 0
      %p109 = por %p107, %p108
      %s111 = sadd.s32 %s110, 1
      %p114 = scmp.eq.s32.totalorder %s13, 1
      %p115 = scmp.ne.s32.totalorder %s110, %s112
      %p116 = scmp.eq.s32.totalorder %s13, 0
      %p117 = por %p115, %p116
      %p118 = scmp.ne.s32.totalorder %s110, %s112
      %p119 = scmp.eq.s32.totalorder %s18, 1
      %p120 = por %p118, %p119
      %p121 = scmp.ne.s32.totalorder %s112, %s113
      %p122 = scmp.eq.s32.totalorder %s18, 0
      %p123 = por %p121, %p122
      %p124 = scmp.ne.s32.totalorder %s112, %s113
      %p125 = scmp.eq.s32.totalorder %s19, 1
      %p126 = por %p124, %p125
      %p128 = scmp.ne.s32.totalorder %s113, %s127
      %p129 = scmp.eq.s32.totalorder %s19, 0
      %p130 = por %p128, %p129
      %s132 = sadd.s32 %s131, 1
      %p135 = scmp.eq.s32.totalorder %s13, 1
      %p136 = scmp.ne.s32.totalorder %s131, %s133
      %p137 = scmp.eq.s32.totalorder %s13, 0
      %p138 = por %p136, %p137
      %p139 = scmp.ne.s32.totalorder %s131, %s133
      %p140 = scmp.eq.s32.totalorder %s18, 1
      %p141 = por %p139, %p140
      %p142 = scmp.ne.s32.totalorder %s133, %s134
      %p143 = scmp.eq.s32.totalorder %s18, 0
      %p144 = por %p142, %p143
      %p145 = scmp.ne.s32.totalorder %s133, %s134
      %p146 = scmp.eq.s32.totalorder %s19, 1
      %p147 = por %p145, %p146
      %p149 = scmp.ne.s32.totalorder %s134, %s148
      %p150 = scmp.eq.s32.totalorder %s19, 0
      %p151 = por %p149, %p150
      %s153 = sadd.s32 %s152, 1
      %p156 = scmp.eq.s32.totalorder %s13, 1
      %p157 = scmp.ne.s32.totalorder %s152, %s154
      %p158 = scmp.eq.s32.totalorder %s13, 0
      %p159 = por %p157, %p158
      %p160 = scmp.ne.s32.totalorder %s152, %s154
      %p161 = scmp.eq.s32.totalorder %s18, 1
      %p162 = por %p160, %p161
      %p163 = scmp.ne.s32.totalorder %s154, %s155
      %p164 = scmp.eq.s32.totalorder %s18, 0
      %p165 = por %p163, %p164
      %p166 = scmp.ne.s32.totalorder %s154, %s155
      %p167 = scmp.eq.s32.totalorder %s19, 1
      %p168 = por %p166, %p167
      %p170 = scmp.ne.s32.totalorder %s155, %s169
      %p171 = scmp.eq.s32.totalorder %s19, 0
      %p172 = por %p170, %p171
      %s173 = ssub.s32 %s13, %s20
      %p174 = scmp.eq.s32.totalorder %s173, 0
      %s176 = sadd.s32 %s175, 1
      %s177 = scalar_select %p174, %s175, %s176
      %p180 = pneg %p174
      %p181 = scmp.eq.s32.totalorder %s13, 1
      %p182 = por %p180, %p181
      %p183 = scmp.ne.s32.totalorder %s175, %s178
      %p184 = scmp.eq.s32.totalorder %s13, 0
      %p185 = por %p183, %p184
      %p186 = scmp.ne.s32.totalorder %s175, %s178
      %p187 = scmp.eq.s32.totalorder %s18, 1
      %p188 = por %p186, %p187
      %p189 = scmp.ne.s32.totalorder %s178, %s179
      %p190 = scmp.eq.s32.totalorder %s18, 0
      %p191 = por %p189, %p190
      %p192 = scmp.ne.s32.totalorder %s178, %s179
      %p193 = scmp.eq.s32.totalorder %s19, 1
      %p194 = por %p192, %p193
      %p196 = scmp.ne.s32.totalorder %s179, %s195
      %p197 = scmp.eq.s32.totalorder %s19, 0
      %p198 = por %p196, %p197
      %p199 = scmp.le.s32.totalorder 1, %s13
      %p200 = scmp.lt.s32.totalorder %s13, 3
      %p201 = pnand %p199, %p200
      %p202 = pneg %p201
      // Predicated region
      $region9: #{swiglu_ffn.1} parent=5 // pred_check
        _
      $region10: #{swiglu_ffn.1} parent=5 // pred_check_branch
        %204 = sbr.rel (%p201) target = $region12
      $region11: #{swiglu_ffn.1} parent=5 // pred_region
        %s205 = ssub.s32 %s13, 1
        // Predicated region
        $region13: #{swiglu_ffn.1} parent=11 // pred_check
          %p206 = pneg %p60
        $region14: #{swiglu_ffn.1} parent=11 // pred_check_branch
          %208 = sbr.rel (%p206) target = $region16
        $region15: #{swiglu_ffn.1} parent=11 // pred_region
          _
        $region16: #{swiglu_ffn.1} parent=11 // pred_fallthru
          _
        // Predicated region
        $region17: #{swiglu_ffn.1} parent=11 // pred_check
          %p209 = pneg %p81
        $region18: #{swiglu_ffn.1} parent=11 // pred_check_branch
          %211 = sbr.rel (%p209) target = $region20
        $region19: #{swiglu_ffn.1} parent=11 // pred_region
          _
        $region20: #{swiglu_ffn.1} parent=11 // pred_fallthru
          _
        // Predicated region
        $region21: #{swiglu_ffn.1} parent=11 // pred_check
          %p212 = pneg %p102
        $region22: #{swiglu_ffn.1} parent=11 // pred_check_branch
          %214 = sbr.rel (%p212) target = $region24
        $region23: #{swiglu_ffn.1} parent=11 // pred_region
          _
        $region24: #{swiglu_ffn.1} parent=11 // pred_fallthru
          _
        // Predicated region
        $region25: #{swiglu_ffn.1} parent=11 // pred_check
          %p215 = pneg %p123
        $region26: #{swiglu_ffn.1} parent=11 // pred_check_branch
          %217 = sbr.rel (%p215) target = $region28
        $region27: #{swiglu_ffn.1} parent=11 // pred_region
          _
        $region28: #{swiglu_ffn.1} parent=11 // pred_fallthru
          _
        // Predicated region
        $region29: #{swiglu_ffn.1} parent=11 // pred_check
          %p218 = pneg %p144
        $region30: #{swiglu_ffn.1} parent=11 // pred_check_branch
          %220 = sbr.rel (%p218) target = $region32
        $region31: #{swiglu_ffn.1} parent=11 // pred_region
          _
        $region32: #{swiglu_ffn.1} parent=11 // pred_fallthru
          _
        // Predicated region
        $region33: #{swiglu_ffn.1} parent=11 // pred_check
          %p221 = pneg %p165
        $region34: #{swiglu_ffn.1} parent=11 // pred_check_branch
          %223 = sbr.rel (%p221) target = $region36
        $region35: #{swiglu_ffn.1} parent=11 // pred_region
          _
        $region36: #{swiglu_ffn.1} parent=11 // pred_fallthru
          _
      $region12: #{swiglu_ffn.1} parent=5 // pred_fallthru
        _
      %p224 = scmp.lt.s32.totalorder %s13, 2
      // Predicated region
      $region37: #{swiglu_ffn.1} parent=5 // pred_check
        %p225 = pneg %p224
      $region38: #{swiglu_ffn.1} parent=5 // pred_check_branch
        %227 = sbr.rel (%p225) target = $region40
      $region39: #{swiglu_ffn.1} parent=5 // pred_region
        // Predicated region
        $region41: #{swiglu_ffn.1} parent=39 // pred_check
          %p228 = pneg %p33
        $region42: #{swiglu_ffn.1} parent=39 // pred_check_branch
          %230 = sbr.rel (%p228) target = $region44
        $region43: #{swiglu_ffn.1} parent=39 // pred_region
          %s231 = smul.u32 2, %s13
          %s232 = ssub.s32 3, %s231
          %p233 = scmp.lt.s32.totalorder %s232, 2
          %s234 = scalar_select %p233, %s232, 2
          %s235 = smul.u32 8, %s234
          %p236 = scmp.lt.s32.totalorder %s231, 2
          %s237 = scalar_select %p236, %s231, 2
          %s238 = smul.addr %s237, 8
          %s239 = scalar_lea.vmem %s0, %s238
          %s240 = smul.u32 2, %s13
          %s241 = ssub.s32 3, %s240
          %p242 = scmp.lt.s32.totalorder %s241, 2
          %s243 = scalar_select %p242, %s241, 2
          %s244 = smul.u32 8, %s243
        $region44: #{swiglu_ffn.1} parent=39 // pred_fallthru
          _
      $region40: #{swiglu_ffn.1} parent=5 // pred_fallthru
        _
      %p245 = scmp.le.s32.totalorder 1, %s13
      %p246 = scmp.lt.s32.totalorder %s13, 3
      %p247 = pnand %p245, %p246
      %p248 = pneg %p247
      // Predicated region
      $region45: #{swiglu_ffn.1} parent=5 // pred_check
        _
      $region46: #{swiglu_ffn.1} parent=5 // pred_check_branch
        %250 = sbr.rel (%p247) target = $region48
      $region47: #{swiglu_ffn.1} parent=5 // pred_region
        %s251 = ssub.s32 %s13, 1
        %s252 = smul.u32 2, %s18
        %s253 = ssub.s32 3, %s252
        %p254 = scmp.lt.s32.totalorder %s253, 2
        %s255 = scalar_select %p254, %s253, 2
        %s256 = smul.u32 8, %s255
        %p257 = scmp.lt.s32.totalorder %s252, 2
        %s258 = scalar_select %p257, %s252, 2
        %s259 = smul.addr %s258, 8
        %s260 = scalar_lea.vmem %s0, %s259
        %p261 = pneg %p39
        %p262 = pneg %p36
        %p263 = pneg %p60
        %p264 = pneg %p57
        %p265 = pneg %p81
        %p266 = pneg %p78
        %p267 = pneg %p102
        %p268 = pneg %p99
        %p269 = pneg %p123
        %p270 = pneg %p120
        %p271 = pneg %p144
        %p272 = pneg %p141
        %p273 = pneg %p165
        %p274 = pneg %p162
        %p275 = pneg %p191
        %p276 = pneg %p188
        %s277 = sand.u32 %s178, 1
        %s278 = sand.u32 %s178, 1
        %s279 = smul.addr %s278, 16
        %s280 = scalar_lea.vmem [#allocation2], %s279
        %s281 = smul.u32 2, %s18
        %s282 = ssub.s32 3, %s281
        %p283 = scmp.lt.s32.totalorder %s282, 2
        %s284 = scalar_select %p283, %s282, 2
        %s285 = smul.u32 8, %s284
        %p286 = scmp.lt.s32.totalorder %s281, 2
        %s287 = scalar_select %p286, %s281, 2
        %s288 = smul.addr %s287, 8
        %s289 = scalar_lea.vmem %s0, %s288
        %s290 = smul.u32 2, %s18
        %s291 = ssub.s32 3, %s290
        %p292 = scmp.lt.s32.totalorder %s291, 2
        %s293 = scalar_select %p292, %s291, 2
        %s294 = smul.u32 8, %s293
        %s295 = smul.u32 2, %s18
        %s296 = ssub.s32 3, %s295
        %p297 = scmp.lt.s32.totalorder %s296, 2
        %s298 = scalar_select %p297, %s296, 2
        %s299 = smul.u32 8, %s298
        %v302 = vld [vmem:[%s289] sm:$0xff]
        %v303 = vld [vmem:[%s289 + $0x8] sm:$0xff]
        %v304 = vpack.c.bf16 %v303, %v302
        %v305 = vld [vmem:[%s1] sm:$0xf]
        %v306 = vld [vmem:[%s1 + $0x4] sm:$0xf]
        %v307 = vld [vmem:[%s1 + $0x8] sm:$0xf]
        %v308 = vld [vmem:[%s1 + $0xc] sm:$0xf]
        %v309 = vld [vmem:[%s2] sm:$0xf]
        %v310 = vld [vmem:[%s2 + $0x4] sm:$0xf]
        %v311 = vld [vmem:[%s2 + $0x8] sm:$0xf]
        %v312 = vld [vmem:[%s2 + $0xc] sm:$0xf]
        %v313 = vld [vmem:[%s3] sm:$0x1]
        %v315 = vperm.slane %v313, 0
        %v321 = vunpack.c.l.b16 %v305
        %v322 = vunpack.c.l.b16 %v306
        %v323 = vunpack.c.l.b16 %v307
        %v324 = vunpack.c.l.b16 %v308
        %v325 = vpack.c.b16 %v322, %v321
        %v326 = vpack.c.b16 %v324, %v323
        %vm329 = vcmask 261120
        %v331 = vsel %vm329, %v304, 0
        %333 = vmatpush.bf16.msra.mxu0 0
        %334 = vmatpush.bf16.msra.mxu0 0
        %335 = vmatpush.bf16.msra.mxu0 0
        %336 = vmatpush.bf16.msra.mxu0 0
        %337 = vmatpush.bf16.msra.mxu0 0
        %338 = vmatpush.bf16.msra.mxu0 0
        %339 = vmatpush.bf16.msra.mxu0 %v326
        %340 = vmatpush.bf16.msra.mxu0 %v325
        %341 = vmatmul.bf16.gmra.mxu0 %v331
        %v342 = vpop.f32.mrf.mxu0
        %v343 = vadd.f32 %v315, %v342
        %v344 = vpop.f32.mrf.mxu0
        %v345 = vadd.f32 %v315, %v344
        %346 = vdwg.mxu0
        %v347 = vpack.c.bf16 %v343, %v343
        %v348 = vpack.c.bf16 %v345, %v345
        %v349 = vld [vmem:[%s4] sm:$0x1]
        %v351 = vperm.slane %v349, 0
        %v357 = vunpack.c.l.b16 %v309
        %v358 = vunpack.c.l.b16 %v310
        %v359 = vunpack.c.l.b16 %v311
        %v360 = vunpack.c.l.b16 %v312
        %v361 = vpack.c.b16 %v358, %v357
        %v362 = vpack.c.b16 %v360, %v359
        %365 = vmatpush.bf16.msra.mxu0 0
        %366 = vmatpush.bf16.msra.mxu0 0
        %367 = vmatpush.bf16.msra.mxu0 0
        %368 = vmatpush.bf16.msra.mxu0 0
        %369 = vmatpush.bf16.msra.mxu0 0
        %370 = vmatpush.bf16.msra.mxu0 0
        %371 = vmatpush.bf16.msra.mxu0 %v362
        %372 = vmatpush.bf16.msra.mxu0 %v361
        %373 = vmatmul.bf16.gmra.mxu0 %v331
        %v374 = vpop.f32.mrf.mxu0
        %v375 = vadd.f32 %v351, %v374
        %v376 = vpop.f32.mrf.mxu0
        %v377 = vadd.f32 %v351, %v376
        %378 = vdwg.mxu0
        %v379 = vpack.c.bf16 %v375, %v375
        %v380 = vpack.c.bf16 %v377, %v377
        %v381 = vxor.u32 %v347, 2147516416
        %v382 = vxor.u32 %v348, 2147516416
        %v383 = vunpack.c.l.bf16 %v381
        %v384 = vunpack.c.l.bf16 %v382
        %v385 = vmul.f32 %v383, 1.442695
        %v386 = vpow.pop %v385
        %v387 = vmul.f32 %v384, 1.442695
        %v388 = vpow.pop %v387
        %v389 = vpack.c.bf16 %v386, %v386
        %v390 = vpack.c.bf16 %v388, %v388
        %v391 = vunpack.c.l.bf16 %v389
        %v392 = vunpack.c.l.bf16 %v390
        %v393 = vadd.f32 %v391, 1.0
        %v394 = vadd.f32 %v392, 1.0
        %v395 = vpack.c.bf16 %v393, %v393
        %v396 = vpack.c.bf16 %v394, %v394
        %v397 = vunpack.c.h.bf16 1065369472
        %v398 = vunpack.c.l.bf16 1065369472
        %v399 = vunpack.c.h.bf16 %v395
        %v400 = vunpack.c.l.bf16 %v395
        %v401 = vrcp.pop %v399
        %v402 = vmul.f32 %v397, %v401
        %v403 = vrcp.pop %v400
        %v404 = vmul.f32 %v398, %v403
        %v405 = vpack.c.bf16 %v402, %v404
        %v406 = vunpack.c.h.bf16 %v396
        %v407 = vunpack.c.l.bf16 %v396
        %v408 = vrcp.pop %v406
        %v409 = vmul.f32 %v397, %v408
        %v410 = vrcp.pop %v407
        %v411 = vmul.f32 %v398, %v410
        %v412 = vpack.c.bf16 %v409, %v411
        %v413 = vunpack.c.l.bf16 %v347
        %v414 = vunpack.c.l.bf16 %v348
        %v415 = vunpack.c.l.bf16 %v405
        %v416 = vunpack.c.l.bf16 %v412
        %v417 = vmul.f32 %v413, %v415
        %v418 = vmul.f32 %v414, %v416
        %v419 = vpack.c.bf16 %v417, %v417
        %v420 = vpack.c.bf16 %v418, %v418
        %v421 = vunpack.c.l.bf16 %v419
        %v422 = vunpack.c.l.bf16 %v420
        %v423 = vunpack.c.l.bf16 %v379
        %v424 = vunpack.c.l.bf16 %v380
        %v425 = vmul.f32 %v421, %v423
        %v426 = vmul.f32 %v422, %v424
        %v427 = vpack.c.bf16 %v426, %v425
        %v428 = vld [vmem:[%s5] sm:$0xf]
        %v429 = vld [vmem:[%s5 + $0x4] sm:$0xf]
        %v430 = vld [vmem:[%s5 + $0x8] sm:$0xf]
        %v431 = vld [vmem:[%s5 + $0xc] sm:$0xf]
        %v432 = vld [vmem:[%s6] sm:$0x1]
        %v434 = vperm.slane %v432, 0
        %v440 = vunpack.c.l.b16 %v428
        %v441 = vunpack.c.l.b16 %v429
        %v442 = vunpack.c.l.b16 %v430
        %v443 = vunpack.c.l.b16 %v431
        %v444 = vpack.c.b16 %v441, %v440
        %v445 = vpack.c.b16 %v443, %v442
        %v449 = vsel %vm329, %v427, 0
        %451 = vmatpush.bf16.msra.mxu0 0
        %452 = vmatpush.bf16.msra.mxu0 0
        %453 = vmatpush.bf16.msra.mxu0 0
        %454 = vmatpush.bf16.msra.mxu0 0
        %455 = vmatpush.bf16.msra.mxu0 0
        %456 = vmatpush.bf16.msra.mxu0 0
        %457 = vmatpush.bf16.msra.mxu0 %v445
        %458 = vmatpush.bf16.msra.mxu0 %v444
        %459 = vmatmul.bf16.gmra.mxu0 %v449
        %v460 = vpop.f32.mrf.mxu0
        %v461 = vadd.f32 %v434, %v460
        %v462 = vpop.f32.mrf.mxu0
        %v463 = vadd.f32 %v434, %v462
        %464 = vdwg.mxu0
        %v465 = vadd.f32 %v302, %v461
        %v466 = vadd.f32 %v303, %v463
        %467 = vst.msk [vmem:[%s280] sm:$0xff] %vm329, %v465
        %468 = vst.msk [vmem:[%s280 + $0x8] sm:$0xff] %vm329, %v466
        %s469 = sand.u32 %s178, 1
        %s470 = sand.u32 %s178, 1
        %s471 = smul.addr %s470, 16
        %s472 = scalar_lea.vmem [#allocation2], %s471
        // Predicated region
        $region49: #{swiglu_ffn.1} parent=47 // pred_check
          %p473 = pneg %p188
        $region50: #{swiglu_ffn.1} parent=47 // pred_check_branch
          %475 = sbr.rel (%p473) target = $region52
        $region51: #{swiglu_ffn.1} parent=47 // pred_region
          %s476 = smul.u32 2, %s18
          %s477 = ssub.s32 3, %s476
          %p478 = scmp.lt.s32.totalorder %s477, 2
          %s479 = scalar_select %p478, %s477, 2
          %s480 = smul.u32 8, %s479
          %p481 = scmp.ne.s32.totalorder 0, %s480
          %s482 = smul.addr %s476, 8
          %s483 = scalar_lea.vmem %s7, %s482
          // Predicated region
          $region53: #{swiglu_ffn.1} parent=51 // pred_check
            %p484 = pneg %p481
          $region54: #{swiglu_ffn.1} parent=51 // pred_check_branch
            %486 = sbr.rel (%p484) target = $region56
          $region55: #{swiglu_ffn.1} parent=51 // pred_region
            // Predicated region
            $region57: #{swiglu_ffn.1} parent=55 // pred_check
              _
            $region58: #{swiglu_ffn.1} parent=55 // pred_check_branch
              %488 = sbr.rel (0) target = $region60
            $region59: #{swiglu_ffn.1} parent=55 // pred_region
              // Predicated region
              $region79: #{swiglu_ffn.1} parent=59 // pred_check
                _
              $region80: #{swiglu_ffn.1} parent=59 // pred_check_branch
                %540 = sbr.rel (0) target = $region82
              $region81: #{swiglu_ffn.1} parent=59 // pred_region
                %s541 = sshrl.u32 %s479, 1
                // While loop
                $region83: #{swiglu_ffn.1} parent=81 // loop_pre_header
                  _
                $region84: #{swiglu_ffn.1} parent=81 // loop_header
                  %s543 = sphi 0, %s545
                  %p544 = scmp.ge.s32.totalorder %s543, %s541
                  %s548 = sphi 0, %s557
                  %s549 = sphi %s472, %s560
                  %s550 = sphi %s483, %s561
                $region85: #{swiglu_ffn.1} parent=81 // loop_header_branch
                  %547 = sbr.rel (%p544) target = $region89
                $region86: #{swiglu_ffn.1} parent=81 // loop_body
                  %v551 = vld [vmem:[%s549] sm:$0xff]
                  %552 = vst [vmem:[%s550] sm:$0xff] %v551
                  %v553 = vld [vmem:[%s549 + $0x8] sm:$0xff]
                  %554 = vst [vmem:[%s550 + $0x8] sm:$0xff] %v553
                  %s555 = sadd.s32 1, %s548
                  %p556 = scmp.ge.s32.totalorder %s555, %s541
                  %s557 = scalar_select %p556, 0, %s555
                  %s558 = smul.u32 %s557, 16
                  %s559 = smul.u32 %s557, 16
                  %s560 = scalar_lea.vmem %s472, %s558 [#allocation2]
                  %s561 = scalar_lea.vmem %s483, %s559
                $region87: #{swiglu_ffn.1} parent=81 // loop_footer
                  %s545 = sadd.s32 %s543, 1
                $region88: #{swiglu_ffn.1} parent=81 // loop_footer_branch
                  %542 = sbr.rel target = $region84
                $region89: #{swiglu_ffn.1} parent=81 // loop_exit
                  _
                %s562 = sshrl.u32 %s479, 1
                %s563 = sand.u32 %s479, 1
                %s564 = smul.u32 %s562, 2
                %s565 = smul.u32 8, %s564
                %s566 = scalar_lea.vmem %s472, %s565 [#allocation2]
                %s567 = smul.u32 8, %s564
                %s568 = scalar_lea.vmem %s483, %s567
                // While loop
                $region90: #{swiglu_ffn.1} parent=81 // loop_pre_header
                  _
                $region91: #{swiglu_ffn.1} parent=81 // loop_header
                  %s570 = sphi 0, %s572
                  %p571 = scmp.ge.s32.totalorder %s570, %s563
                  %s575 = sphi 0, %s582
                  %s576 = sphi %s566, %s585
                  %s577 = sphi %s568, %s586
                $region92: #{swiglu_ffn.1} parent=81 // loop_header_branch
                  %574 = sbr.rel (%p571) target = $region96
                $region93: #{swiglu_ffn.1} parent=81 // loop_body
                  %v578 = vld [vmem:[%s576] sm:$0xff]
                  %579 = vst [vmem:[%s577] sm:$0xff] %v578
                  %s580 = sadd.s32 1, %s575
                  %p581 = scmp.ge.s32.totalorder %s580, %s563
                  %s582 = scalar_select %p581, 0, %s580
                  %s583 = smul.u32 %s582, 8
                  %s584 = smul.u32 %s582, 8
                  %s585 = scalar_lea.vmem %s566, %s583 [#allocation2]
                  %s586 = scalar_lea.vmem %s568, %s584
                $region94: #{swiglu_ffn.1} parent=81 // loop_footer
                  %s572 = sadd.s32 %s570, 1
                $region95: #{swiglu_ffn.1} parent=81 // loop_footer_branch
                  %569 = sbr.rel target = $region91
                $region96: #{swiglu_ffn.1} parent=81 // loop_exit
                  _
              $region82: #{swiglu_ffn.1} parent=59 // pred_fallthru
                _
              // Predicated region
              $region97: #{swiglu_ffn.1} parent=59 // pred_check
                _
              $region98: #{swiglu_ffn.1} parent=59 // pred_check_branch
                %588 = sbr.rel target = $region100
              $region99: #{swiglu_ffn.1} parent=59 // pred_region
                _
              $region100: #{swiglu_ffn.1} parent=59 // pred_fallthru
                _
            $region60: #{swiglu_ffn.1} parent=55 // pred_fallthru
              _
            // Predicated region
            $region61: #{swiglu_ffn.1} parent=55 // pred_check
              _
            $region62: #{swiglu_ffn.1} parent=55 // pred_check_branch
              %490 = sbr.rel target = $region64
            $region63: #{swiglu_ffn.1} parent=55 // pred_region
              %s492 = ssub.s32 256, 1
              %s493 = sshrl.u32 %s479, 1
              // While loop
              $region65: #{swiglu_ffn.1} parent=63 // loop_pre_header
                _
              $region66: #{swiglu_ffn.1} parent=63 // loop_header
                %s495 = sphi 0, %s497
                %p496 = scmp.ge.s32.totalorder %s495, %s493
                %s500 = sphi 0, %s509
                %s501 = sphi %s472, %s512
                %s502 = sphi %s483, %s513
              $region67: #{swiglu_ffn.1} parent=63 // loop_header_branch
                %499 = sbr.rel (%p496) target = $region71
              $region68: #{swiglu_ffn.1} parent=63 // loop_body
                %v503 = vld [vmem:[%s501] sm:%s492]
                %504 = vst [vmem:[%s502] sm:%s492] %v503
                %v505 = vld [vmem:[%s501 + $0x8] sm:%s492]
                %506 = vst [vmem:[%s502 + $0x8] sm:%s492] %v505
                %s507 = sadd.s32 1, %s500
                %p508 = scmp.ge.s32.totalorder %s507, %s493
                %s509 = scalar_select %p508, 0, %s507
                %s510 = smul.u32 %s509, 16
                %s511 = smul.u32 %s509, 16
                %s512 = scalar_lea.vmem %s472, %s510 [#allocation2]
                %s513 = scalar_lea.vmem %s483, %s511
              $region69: #{swiglu_ffn.1} parent=63 // loop_footer
                %s497 = sadd.s32 %s495, 1
              $region70: #{swiglu_ffn.1} parent=63 // loop_footer_branch
                %494 = sbr.rel target = $region66
              $region71: #{swiglu_ffn.1} parent=63 // loop_exit
                _
              %s514 = sshrl.u32 %s479, 1
              %s515 = sand.u32 %s479, 1
              %s516 = smul.u32 %s514, 2
              %s517 = smul.u32 8, %s516
              %s518 = scalar_lea.vmem %s472, %s517 [#allocation2]
              %s519 = smul.u32 8, %s516
              %s520 = scalar_lea.vmem %s483, %s519
              // While loop
              $region72: #{swiglu_ffn.1} parent=63 // loop_pre_header
                _
              $region73: #{swiglu_ffn.1} parent=63 // loop_header
                %s522 = sphi 0, %s524
                %p523 = scmp.ge.s32.totalorder %s522, %s515
                %s527 = sphi 0, %s534
                %s528 = sphi %s518, %s537
                %s529 = sphi %s520, %s538
              $region74: #{swiglu_ffn.1} parent=63 // loop_header_branch
                %526 = sbr.rel (%p523) target = $region78
              $region75: #{swiglu_ffn.1} parent=63 // loop_body
                %v530 = vld [vmem:[%s528] sm:%s492]
                %531 = vst [vmem:[%s529] sm:%s492] %v530
                %s532 = sadd.s32 1, %s527
                %p533 = scmp.ge.s32.totalorder %s532, %s515
                %s534 = scalar_select %p533, 0, %s532
                %s535 = smul.u32 %s534, 8
                %s536 = smul.u32 %s534, 8
                %s537 = scalar_lea.vmem %s518, %s535 [#allocation2]
                %s538 = scalar_lea.vmem %s520, %s536
              $region76: #{swiglu_ffn.1} parent=63 // loop_footer
                %s524 = sadd.s32 %s522, 1
              $region77: #{swiglu_ffn.1} parent=63 // loop_footer_branch
                %521 = sbr.rel target = $region73
              $region78: #{swiglu_ffn.1} parent=63 // loop_exit
                _
            $region64: #{swiglu_ffn.1} parent=55 // pred_fallthru
              _
          $region56: #{swiglu_ffn.1} parent=51 // pred_fallthru
            _
          %589 = vnop
        $region52: #{swiglu_ffn.1} parent=47 // pred_fallthru
          _
      $region48: #{swiglu_ffn.1} parent=5 // pred_fallthru
        _
      %p590 = scmp.le.s32.totalorder 2, %s13
      // Predicated region
      $region101: #{swiglu_ffn.1} parent=5 // pred_check
        %p591 = pneg %p590
      $region102: #{swiglu_ffn.1} parent=5 // pred_check_branch
        %593 = sbr.rel (%p591) target = $region104
      $region103: #{swiglu_ffn.1} parent=5 // pred_region
        %s594 = ssub.s32 %s13, 2
        // Predicated region
        $region105: #{swiglu_ffn.1} parent=103 // pred_check
          %p595 = pneg %p194
        $region106: #{swiglu_ffn.1} parent=103 // pred_check_branch
          %597 = sbr.rel (%p595) target = $region108
        $region107: #{swiglu_ffn.1} parent=103 // pred_region
          %s598 = sand.u32 %s179, 1
          %s599 = sand.u32 %s179, 1
          %s600 = smul.addr %s599, 16
          %s601 = scalar_lea.vmem [#allocation2], %s600
        $region108: #{swiglu_ffn.1} parent=103 // pred_fallthru
          _
      $region104: #{swiglu_ffn.1} parent=5 // pred_fallthru
        _
    $region6: #{swiglu_ffn.1} parent=1 // loop_footer
      %s17 = sadd.s32 1, %s13
    $region7: #{swiglu_ffn.1} parent=1 // loop_footer_branch
      %12 = sbr.rel target = $region3
    $region8: #{swiglu_ffn.1} parent=1 // loop_exit
      _

// kernel: swiglu_ffn.1
$region0: #{swiglu_ffn.1}
  #allocation0 [shape = 'u32[]', space=smem, size = 0x4, offset = 0x4, fixed_abs, tag = 'smem constant byte address 0x4 - core index']
  #allocation1 [shape = 'u32[72,128]{1,0:T(1,128)}', space=vmem, size = 0x9000, scoped, tag = 'internal scratch']
  %s0 = inlined_call_operand.vmem [shape: f32[18,32], index: 0, kind: input, shape index: {}]
  %s1 = inlined_call_operand.vmem [shape: bf16[32,32], index: 1, kind: input, shape index: {}]
  %s2 = inlined_call_operand.vmem [shape: bf16[32,32], index: 2, kind: input, shape index: {}]
  %s3 = inlined_call_operand.vmem [shape: f32[1,32], index: 3, kind: input, shape index: {}]
  %s4 = inlined_call_operand.vmem [shape: f32[1,32], index: 4, kind: input, shape index: {}]
  %s5 = inlined_call_operand.vmem [shape: bf16[32,32], index: 5, kind: input, shape index: {}]
  %s6 = inlined_call_operand.vmem [shape: f32[1,32], index: 6, kind: input, shape index: {}]
  %s7 = inlined_call_operand.vmem [shape: f32[18,32], index: 7, kind: output, shape index: {}]
  %s8 = sld [smem:[#allocation0]]
  $region109: #{swiglu_ffn.1} parent=0
    _
  %s10 = ssub.s32 1, %s8
  %s11 = scalar_select 0, %s10, %s8
  $region1: #{swiglu_ffn.1} parent=0
    #allocation2 [shape = 'u8[16384]{0}', space=vmem, size = 0x4000, scoped, tag = 'output window, operand 0']
    loop: start=0, step=1, limit=4
    $region2: #{swiglu_ffn.1} parent=1 // loop_pre_header
      _
    $region3: #{swiglu_ffn.1} parent=1 // loop_header
      %s13 = sphi 0, %s17
      %p14 = scmp.ge.s32.totalorder %s13, 4
      %s23 = sphi 0, %s25
      %s26 = sphi 0, %s23
      %s27 = sphi 0, %s26
      %s43 = sphi 0, %s27
      %s47 = sphi 0, %s47
      %s49 = sphi 0, %s47
      %s50 = sphi 0, %s49
      %s64 = sphi 0, %s50
      %s68 = sphi 0, %s68
      %s70 = sphi 0, %s68
      %s71 = sphi 0, %s70
      %s85 = sphi 0, %s71
      %s89 = sphi 0, %s89
      %s91 = sphi 0, %s89
      %s92 = sphi 0, %s91
      %s106 = sphi 0, %s92
      %s110 = sphi 0, %s110
      %s112 = sphi 0, %s110
      %s113 = sphi 0, %s112
      %s127 = sphi 0, %s113
      %s131 = sphi 0, %s131
      %s133 = sphi 0, %s131
      %s134 = sphi 0, %s133
      %s148 = sphi 0, %s134
      %s152 = sphi 0, %s152
      %s154 = sphi 0, %s152
      %s155 = sphi 0, %s154
      %s169 = sphi 0, %s155
      %s175 = sphi 0, %s177
      %s178 = sphi 0, %s175
      %s179 = sphi 0, %s178
      %s195 = sphi 0, %s179
    $region4: #{swiglu_ffn.1} parent=1 // loop_header_branch
      %16 = sbr.rel (%p14) target = $region8
    $region5: #{swiglu_ffn.1} parent=1 // loop_body
      %s18 = ssub.s32 %s13, 1
      %s19 = ssub.s32 %s13, 2
      %s20 = sadd.s32 %s13, 1
      %s21 = ssub.s32 %s13, %s20
      %p22 = scmp.eq.s32.totalorder %s21, 0
      %s24 = sadd.s32 %s23, 1
      %s25 = scalar_select %p22, %s23, %s24
      %p28 = pneg %p22
      %p29 = scmp.eq.s32.totalorder %s13, 1
      %p30 = por %p28, %p29
      %p31 = scmp.ne.s32.totalorder %s23, %s26
      %p32 = scmp.eq.s32.totalorder %s13, 0
      %p33 = por %p31, %p32
      %p34 = scmp.ne.s32.totalorder %s23, %s26
      %p35 = scmp.eq.s32.totalorder %s18, 1
      %p36 = por %p34, %p35
      %p37 = scmp.ne.s32.totalorder %s26, %s27
      %p38 = scmp.eq.s32.totalorder %s18, 0
      %p39 = por %p37, %p38
      %p40 = scmp.ne.s32.totalorder %s26, %s27
      %p41 = scmp.eq.s32.totalorder %s19, 1
      %p42 = por %p40, %p41
      %p44 = scmp.ne.s32.totalorder %s27, %s43
      %p45 = scmp.eq.s32.totalorder %s19, 0
      %p46 = por %p44, %p45
      %s48 = sadd.s32 %s47, 1
      %p51 = scmp.eq.s32.totalorder %s13, 1
      %p52 = scmp.ne.s32.totalorder %s47, %s49
      %p53 = scmp.eq.s32.totalorder %s13, 0
      %p54 = por %p52, %p53
      %p55 = scmp.ne.s32.totalorder %s47, %s49
      %p56 = scmp.eq.s32.totalorder %s18, 1
      %p57 = por %p55, %p56
      %p58 = scmp.ne.s32.totalorder %s49, %s50
      %p59 = scmp.eq.s32.totalorder %s18, 0
      %p60 = por %p58, %p59
      %p61 = scmp.ne.s32.totalorder %s49, %s50
      %p62 = scmp.eq.s32.totalorder %s19, 1
      %p63 = por %p61, %p62
      %p65 = scmp.ne.s32.totalorder %s50, %s64
      %p66 = scmp.eq.s32.totalorder %s19, 0
      %p67 = por %p65, %p66
      %s69 = sadd.s32 %s68, 1
      %p72 = scmp.eq.s32.totalorder %s13, 1
      %p73 = scmp.ne.s32.totalorder %s68, %s70
      %p74 = scmp.eq.s32.totalorder %s13, 0
      %p75 = por %p73, %p74
      %p76 = scmp.ne.s32.totalorder %s68, %s70
      %p77 = scmp.eq.s32.totalorder %s18, 1
      %p78 = por %p76, %p77
      %p79 = scmp.ne.s32.totalorder %s70, %s71
      %p80 = scmp.eq.s32.totalorder %s18, 0
      %p81 = por %p79, %p80
      %p82 = scmp.ne.s32.totalorder %s70, %s71
      %p83 = scmp.eq.s32.totalorder %s19, 1
      %p84 = por %p82, %p83
      %p86 = scmp.ne.s32.totalorder %s71, %s85
      %p87 = scmp.eq.s32.totalorder %s19, 0
      %p88 = por %p86, %p87
      %s90 = sadd.s32 %s89, 1
      %p93 = scmp.eq.s32.totalorder %s13, 1
      %p94 = scmp.ne.s32.totalorder %s89, %s91
      %p95 = scmp.eq.s32.totalorder %s13, 0
      %p96 = por %p94, %p95
      %p97 = scmp.ne.s32.totalorder %s89, %s91
      %p98 = scmp.eq.s32.totalorder %s18, 1
      %p99 = por %p97, %p98
      %p100 = scmp.ne.s32.totalorder %s91, %s92
      %p101 = scmp.eq.s32.totalorder %s18, 0
      %p102 = por %p100, %p101
      %p103 = scmp.ne.s32.totalorder %s91, %s92
      %p104 = scmp.eq.s32.totalorder %s19, 1
      %p105 = por %p103, %p104
      %p107 = scmp.ne.s32.totalorder %s92, %s106
      %p108 = scmp.eq.s32.totalorder %s19, 0
      %p109 = por %p107, %p108
      %s111 = sadd.s32 %s110, 1
      %p114 = scmp.eq.s32.totalorder %s13, 1
      %p115 = scmp.ne.s32.totalorder %s110, %s112
      %p116 = scmp.eq.s32.totalorder %s13, 0
      %p117 = por %p115, %p116
      %p118 = scmp.ne.s32.totalorder %s110, %s112
      %p119 = scmp.eq.s32.totalorder %s18, 1
      %p120 = por %p118, %p119
      %p121 = scmp.ne.s32.totalorder %s112, %s113
      %p122 = scmp.eq.s32.totalorder %s18, 0
      %p123 = por %p121, %p122
      %p124 = scmp.ne.s32.totalorder %s112, %s113
      %p125 = scmp.eq.s32.totalorder %s19, 1
      %p126 = por %p124, %p125
      %p128 = scmp.ne.s32.totalorder %s113, %s127
      %p129 = scmp.eq.s32.totalorder %s19, 0
      %p130 = por %p128, %p129
      %s132 = sadd.s32 %s131, 1
      %p135 = scmp.eq.s32.totalorder %s13, 1
      %p136 = scmp.ne.s32.totalorder %s131, %s133
      %p137 = scmp.eq.s32.totalorder %s13, 0
      %p138 = por %p136, %p137
      %p139 = scmp.ne.s32.totalorder %s131, %s133
      %p140 = scmp.eq.s32.totalorder %s18, 1
      %p141 = por %p139, %p140
      %p142 = scmp.ne.s32.totalorder %s133, %s134
      %p143 = scmp.eq.s32.totalorder %s18, 0
      %p144 = por %p142, %p143
      %p145 = scmp.ne.s32.totalorder %s133, %s134
      %p146 = scmp.eq.s32.totalorder %s19, 1
      %p147 = por %p145, %p146
      %p149 = scmp.ne.s32.totalorder %s134, %s148
      %p150 = scmp.eq.s32.totalorder %s19, 0
      %p151 = por %p149, %p150
      %s153 = sadd.s32 %s152, 1
      %p156 = scmp.eq.s32.totalorder %s13, 1
      %p157 = scmp.ne.s32.totalorder %s152, %s154
      %p158 = scmp.eq.s32.totalorder %s13, 0
      %p159 = por %p157, %p158
      %p160 = scmp.ne.s32.totalorder %s152, %s154
      %p161 = scmp.eq.s32.totalorder %s18, 1
      %p162 = por %p160, %p161
      %p163 = scmp.ne.s32.totalorder %s154, %s155
      %p164 = scmp.eq.s32.totalorder %s18, 0
      %p165 = por %p163, %p164
      %p166 = scmp.ne.s32.totalorder %s154, %s155
      %p167 = scmp.eq.s32.totalorder %s19, 1
      %p168 = por %p166, %p167
      %p170 = scmp.ne.s32.totalorder %s155, %s169
      %p171 = scmp.eq.s32.totalorder %s19, 0
      %p172 = por %p170, %p171
      %s173 = ssub.s32 %s13, %s20
      %p174 = scmp.eq.s32.totalorder %s173, 0
      %s176 = sadd.s32 %s175, 1
      %s177 = scalar_select %p174, %s175, %s176
      %p180 = pneg %p174
      %p181 = scmp.eq.s32.totalorder %s13, 1
      %p182 = por %p180, %p181
      %p183 = scmp.ne.s32.totalorder %s175, %s178
      %p184 = scmp.eq.s32.totalorder %s13, 0
      %p185 = por %p183, %p184
      %p186 = scmp.ne.s32.totalorder %s175, %s178
      %p187 = scmp.eq.s32.totalorder %s18, 1
      %p188 = por %p186, %p187
      %p189 = scmp.ne.s32.totalorder %s178, %s179
      %p190 = scmp.eq.s32.totalorder %s18, 0
      %p191 = por %p189, %p190
      %p192 = scmp.ne.s32.totalorder %s178, %s179
      %p193 = scmp.eq.s32.totalorder %s19, 1
      %p194 = por %p192, %p193
      %p196 = scmp.ne.s32.totalorder %s179, %s195
      %p197 = scmp.eq.s32.totalorder %s19, 0
      %p198 = por %p196, %p197
      %p199 = scmp.le.s32.totalorder 1, %s13
      %p200 = scmp.lt.s32.totalorder %s13, 3
      %p201 = pnand %p199, %p200
      %p202 = pneg %p201
      // Predicated region
      $region9: #{swiglu_ffn.1} parent=5 // pred_check
        _
      $region10: #{swiglu_ffn.1} parent=5 // pred_check_branch
        %204 = sbr.rel (%p201) target = $region12
      $region11: #{swiglu_ffn.1} parent=5 // pred_region
        %s205 = ssub.s32 %s13, 1
        // Predicated region
        $region13: #{swiglu_ffn.1} parent=11 // pred_check
          %p206 = pneg %p60
        $region14: #{swiglu_ffn.1} parent=11 // pred_check_branch
          %208 = sbr.rel (%p206) target = $region16
        $region15: #{swiglu_ffn.1} parent=11 // pred_region
          _
        $region16: #{swiglu_ffn.1} parent=11 // pred_fallthru
          _
        // Predicated region
        $region17: #{swiglu_ffn.1} parent=11 // pred_check
          %p209 = pneg %p81
        $region18: #{swiglu_ffn.1} parent=11 // pred_check_branch
          %211 = sbr.rel (%p209) target = $region20
        $region19: #{swiglu_ffn.1} parent=11 // pred_region
          _
        $region20: #{swiglu_ffn.1} parent=11 // pred_fallthru
          _
        // Predicated region
        $region21: #{swiglu_ffn.1} parent=11 // pred_check
          %p212 = pneg %p102
        $region22: #{swiglu_ffn.1} parent=11 // pred_check_branch
          %214 = sbr.rel (%p212) target = $region24
        $region23: #{swiglu_ffn.1} parent=11 // pred_region
          _
        $region24: #{swiglu_ffn.1} parent=11 // pred_fallthru
          _
        // Predicated region
        $region25: #{swiglu_ffn.1} parent=11 // pred_check
          %p215 = pneg %p123
        $region26: #{swiglu_ffn.1} parent=11 // pred_check_branch
          %217 = sbr.rel (%p215) target = $region28
        $region27: #{swiglu_ffn.1} parent=11 // pred_region
          _
        $region28: #{swiglu_ffn.1} parent=11 // pred_fallthru
          _
        // Predicated region
        $region29: #{swiglu_ffn.1} parent=11 // pred_check
          %p218 = pneg %p144
        $region30: #{swiglu_ffn.1} parent=11 // pred_check_branch
          %220 = sbr.rel (%p218) target = $region32
        $region31: #{swiglu_ffn.1} parent=11 // pred_region
          _
        $region32: #{swiglu_ffn.1} parent=11 // pred_fallthru
          _
        // Predicated region
        $region33: #{swiglu_ffn.1} parent=11 // pred_check
          %p221 = pneg %p165
        $region34: #{swiglu_ffn.1} parent=11 // pred_check_branch
          %223 = sbr.rel (%p221) target = $region36
        $region35: #{swiglu_ffn.1} parent=11 // pred_region
          _
        $region36: #{swiglu_ffn.1} parent=11 // pred_fallthru
          _
      $region12: #{swiglu_ffn.1} parent=5 // pred_fallthru
        _
      %p224 = scmp.lt.s32.totalorder %s13, 2
      // Predicated region
      $region37: #{swiglu_ffn.1} parent=5 // pred_check
        %p225 = pneg %p224
      $region38: #{swiglu_ffn.1} parent=5 // pred_check_branch
        %227 = sbr.rel (%p225) target = $region40
      $region39: #{swiglu_ffn.1} parent=5 // pred_region
        // Predicated region
        $region41: #{swiglu_ffn.1} parent=39 // pred_check
          %p228 = pneg %p33
        $region42: #{swiglu_ffn.1} parent=39 // pred_check_branch
          %230 = sbr.rel (%p228) target = $region44
        $region43: #{swiglu_ffn.1} parent=39 // pred_region
          %s231 = smul.u32 2, %s13
          %s232 = ssub.s32 3, %s231
          %p233 = scmp.lt.s32.totalorder %s232, 2
          %s234 = scalar_select %p233, %s232, 2
          %s235 = smul.u32 8, %s234
          %p236 = scmp.lt.s32.totalorder %s231, 2
          %s237 = scalar_select %p236, %s231, 2
          %s238 = smul.addr %s237, 8
          %s239 = scalar_lea.vmem %s0, %s238
          %s240 = smul.u32 2, %s13
          %s241 = ssub.s32 3, %s240
          %p242 = scmp.lt.s32.totalorder %s241, 2
          %s243 = scalar_select %p242, %s241, 2
          %s244 = smul.u32 8, %s243
        $region44: #{swiglu_ffn.1} parent=39 // pred_fallthru
          _
      $region40: #{swiglu_ffn.1} parent=5 // pred_fallthru
        _
      %p245 = scmp.le.s32.totalorder 1, %s13
      %p246 = scmp.lt.s32.totalorder %s13, 3
      %p247 = pnand %p245, %p246
      %p248 = pneg %p247
      // Predicated region
      $region45: #{swiglu_ffn.1} parent=5 // pred_check
        _
      $region46: #{swiglu_ffn.1} parent=5 // pred_check_branch
        %250 = sbr.rel (%p247) target = $region48
      $region47: #{swiglu_ffn.1} parent=5 // pred_region
        %s251 = ssub.s32 %s13, 1
        %s252 = smul.u32 2, %s18
        %s253 = ssub.s32 3, %s252
        %p254 = scmp.lt.s32.totalorder %s253, 2
        %s255 = scalar_select %p254, %s253, 2
        %s256 = smul.u32 8, %s255
        %p257 = scmp.lt.s32.totalorder %s252, 2
        %s258 = scalar_select %p257, %s252, 2
        %s259 = smul.addr %s258, 8
        %s260 = scalar_lea.vmem %s0, %s259
        %p261 = pneg %p39
        %p262 = pneg %p36
        %p263 = pneg %p60
        %p264 = pneg %p57
        %p265 = pneg %p81
        %p266 = pneg %p78
        %p267 = pneg %p102
        %p268 = pneg %p99
        %p269 = pneg %p123
        %p270 = pneg %p120
        %p271 = pneg %p144
        %p272 = pneg %p141
        %p273 = pneg %p165
        %p274 = pneg %p162
        %p275 = pneg %p191
        %p276 = pneg %p188
        %s277 = sand.u32 %s178, 1
        %s278 = sand.u32 %s178, 1
        %s279 = smul.addr %s278, 16
        %s280 = scalar_lea.vmem [#allocation2], %s279
        %s281 = smul.u32 2, %s18
        %s282 = ssub.s32 3, %s281
        %p283 = scmp.lt.s32.totalorder %s282, 2
        %s284 = scalar_select %p283, %s282, 2
        %s285 = smul.u32 8, %s284
        %p286 = scmp.lt.s32.totalorder %s281, 2
        %s287 = scalar_select %p286, %s281, 2
        %s288 = smul.addr %s287, 8
        %s289 = scalar_lea.vmem %s0, %s288
        %s290 = smul.u32 2, %s18
        %s291 = ssub.s32 3, %s290
        %p292 = scmp.lt.s32.totalorder %s291, 2
        %s293 = scalar_select %p292, %s291, 2
        %s294 = smul.u32 8, %s293
        %s295 = smul.u32 2, %s18
        %s296 = ssub.s32 3, %s295
        %p297 = scmp.lt.s32.totalorder %s296, 2
        %s298 = scalar_select %p297, %s296, 2
        %s299 = smul.u32 8, %s298
        %v302 = vld [vmem:[%s289] sm:$0xff]
        %v303 = vld [vmem:[%s289 + $0x8] sm:$0xff]
        %v304 = vpack.c.bf16 %v303, %v302
        %v305 = vld [vmem:[%s1] sm:$0xf]
        %v306 = vld [vmem:[%s1 + $0x4] sm:$0xf]
        %v307 = vld [vmem:[%s1 + $0x8] sm:$0xf]
        %v308 = vld [vmem:[%s1 + $0xc] sm:$0xf]
        %v309 = vld [vmem:[%s2] sm:$0xf]
        %v310 = vld [vmem:[%s2 + $0x4] sm:$0xf]
        %v311 = vld [vmem:[%s2 + $0x8] sm:$0xf]
        %v312 = vld [vmem:[%s2 + $0xc] sm:$0xf]
        %v313 = vld [vmem:[%s3] sm:$0x1]
        %v315 = vperm.slane %v313, 0
        %v321 = vunpack.c.l.b16 %v305
        %v322 = vunpack.c.l.b16 %v306
        %v323 = vunpack.c.l.b16 %v307
        %v324 = vunpack.c.l.b16 %v308
        %v325 = vpack.c.b16 %v322, %v321
        %v326 = vpack.c.b16 %v324, %v323
        %vm329 = vcmask 261120
        %v331 = vsel %vm329, %v304, 0
        %333 = vmatpush.bf16.msra.mxu0 0
        %334 = vmatpush.bf16.msra.mxu0 0
        %335 = vmatpush.bf16.msra.mxu0 0
        %336 = vmatpush.bf16.msra.mxu0 0
        %337 = vmatpush.bf16.msra.mxu0 0
        %338 = vmatpush.bf16.msra.mxu0 0
        %339 = vmatpush.bf16.msra.mxu0 %v326
        %340 = vmatpush.bf16.msra.mxu0 %v325
        %341 = vmatmul.bf16.gmra.mxu0 %v331
        %v342 = vpop.f32.mrf.mxu0
        %v343 = vadd.f32 %v315, %v342
        %v344 = vpop.f32.mrf.mxu0
        %v345 = vadd.f32 %v315, %v344
        %346 = vdwg.mxu0
        %v347 = vpack.c.bf16 %v343, %v343
        %v348 = vpack.c.bf16 %v345, %v345
        %v349 = vld [vmem:[%s4] sm:$0x1]
        %v351 = vperm.slane %v349, 0
        %v357 = vunpack.c.l.b16 %v309
        %v358 = vunpack.c.l.b16 %v310
        %v359 = vunpack.c.l.b16 %v311
        %v360 = vunpack.c.l.b16 %v312
        %v361 = vpack.c.b16 %v358, %v357
        %v362 = vpack.c.b16 %v360, %v359
        %365 = vmatpush.bf16.msra.mxu0 0
        %366 = vmatpush.bf16.msra.mxu0 0
        %367 = vmatpush.bf16.msra.mxu0 0
        %368 = vmatpush.bf16.msra.mxu0 0
        %369 = vmatpush.bf16.msra.mxu0 0
        %370 = vmatpush.bf16.msra.mxu0 0
        %371 = vmatpush.bf16.msra.mxu0 %v362
        %372 = vmatpush.bf16.msra.mxu0 %v361
        %373 = vmatmul.bf16.gmra.mxu0 %v331
        %v374 = vpop.f32.mrf.mxu0
        %v375 = vadd.f32 %v351, %v374
        %v376 = vpop.f32.mrf.mxu0
        %v377 = vadd.f32 %v351, %v376
        %378 = vdwg.mxu0
        %v379 = vpack.c.bf16 %v375, %v375
        %v380 = vpack.c.bf16 %v377, %v377
        %v381 = vxor.u32 %v347, 2147516416
        %v382 = vxor.u32 %v348, 2147516416
        %v383 = vunpack.c.l.bf16 %v381
        %v384 = vunpack.c.l.bf16 %v382
        %v385 = vmul.f32 %v383, 1.442695
        %v386 = vpow.pop %v385
        %v387 = vmul.f32 %v384, 1.442695
        %v388 = vpow.pop %v387
        %v389 = vpack.c.bf16 %v386, %v386
        %v390 = vpack.c.bf16 %v388, %v388
        %v391 = vunpack.c.l.bf16 %v389
        %v392 = vunpack.c.l.bf16 %v390
        %v393 = vadd.f32 %v391, 1.0
        %v394 = vadd.f32 %v392, 1.0
        %v395 = vpack.c.bf16 %v393, %v393
        %v396 = vpack.c.bf16 %v394, %v394
        %v397 = vunpack.c.h.bf16 1065369472
        %v398 = vunpack.c.l.bf16 1065369472
        %v399 = vunpack.c.h.bf16 %v395
        %v400 = vunpack.c.l.bf16 %v395
        %v401 = vrcp.pop %v399
        %v402 = vmul.f32 %v397, %v401
        %v403 = vrcp.pop %v400
        %v404 = vmul.f32 %v398, %v403
        %v405 = vpack.c.bf16 %v402, %v404
        %v406 = vunpack.c.h.bf16 %v396
        %v407 = vunpack.c.l.bf16 %v396
        %v408 = vrcp.pop %v406
        %v409 = vmul.f32 %v397, %v408
        %v410 = vrcp.pop %v407
        %v411 = vmul.f32 %v398, %v410
        %v412 = vpack.c.bf16 %v409, %v411
        %v413 = vunpack.c.l.bf16 %v347
        %v414 = vunpack.c.l.bf16 %v348
        %v415 = vunpack.c.l.bf16 %v405
        %v416 = vunpack.c.l.bf16 %v412
        %v417 = vmul.f32 %v413, %v415
        %v418 = vmul.f32 %v414, %v416
        %v419 = vpack.c.bf16 %v417, %v417
        %v420 = vpack.c.bf16 %v418, %v418
        %v421 = vunpack.c.l.bf16 %v419
        %v422 = vunpack.c.l.bf16 %v420
        %v423 = vunpack.c.l.bf16 %v379
        %v424 = vunpack.c.l.bf16 %v380
        %v425 = vmul.f32 %v421, %v423
        %v426 = vmul.f32 %v422, %v424
        %v427 = vpack.c.bf16 %v426, %v425
        %v428 = vld [vmem:[%s5] sm:$0xf]
        %v429 = vld [vmem:[%s5 + $0x4] sm:$0xf]
        %v430 = vld [vmem:[%s5 + $0x8] sm:$0xf]
        %v431 = vld [vmem:[%s5 + $0xc] sm:$0xf]
        %v432 = vld [vmem:[%s6] sm:$0x1]
        %v434 = vperm.slane %v432, 0
        %v440 = vunpack.c.l.b16 %v428
        %v441 = vunpack.c.l.b16 %v429
        %v442 = vunpack.c.l.b16 %v430
        %v443 = vunpack.c.l.b16 %v431
        %v444 = vpack.c.b16 %v441, %v440
        %v445 = vpack.c.b16 %v443, %v442
        %v449 = vsel %vm329, %v427, 0
        %451 = vmatpush.bf16.msra.mxu0 0
        %452 = vmatpush.bf16.msra.mxu0 0
        %453 = vmatpush.bf16.msra.mxu0 0
        %454 = vmatpush.bf16.msra.mxu0 0
        %455 = vmatpush.bf16.msra.mxu0 0
        %456 = vmatpush.bf16.msra.mxu0 0
        %457 = vmatpush.bf16.msra.mxu0 %v445
        %458 = vmatpush.bf16.msra.mxu0 %v444
        %459 = vmatmul.bf16.gmra.mxu0 %v449
        %v460 = vpop.f32.mrf.mxu0
        %v461 = vadd.f32 %v434, %v460
        %v462 = vpop.f32.mrf.mxu0
        %v463 = vadd.f32 %v434, %v462
        %464 = vdwg.mxu0
        %v465 = vadd.f32 %v302, %v461
        %v466 = vadd.f32 %v303, %v463
        %467 = vst.msk [vmem:[%s280] sm:$0xff] %vm329, %v465
        %468 = vst.msk [vmem:[%s280 + $0x8] sm:$0xff] %vm329, %v466
        %s469 = sand.u32 %s178, 1
        %s470 = sand.u32 %s178, 1
        %s471 = smul.addr %s470, 16
        %s472 = scalar_lea.vmem [#allocation2], %s471
        // Predicated region
        $region49: #{swiglu_ffn.1} parent=47 // pred_check
          %p473 = pneg %p188
        $region50: #{swiglu_ffn.1} parent=47 // pred_check_branch
          %475 = sbr.rel (%p473) target = $region52
        $region51: #{swiglu_ffn.1} parent=47 // pred_region
          %s476 = smul.u32 2, %s18
          %s477 = ssub.s32 3, %s476
          %p478 = scmp.lt.s32.totalorder %s477, 2
          %s479 = scalar_select %p478, %s477, 2
          %s480 = smul.u32 8, %s479
          %p481 = scmp.ne.s32.totalorder 0, %s480
          %s482 = smul.addr %s476, 8
          %s483 = scalar_lea.vmem %s7, %s482
          // Predicated region
          $region53: #{swiglu_ffn.1} parent=51 // pred_check
            %p484 = pneg %p481
          $region54: #{swiglu_ffn.1} parent=51 // pred_check_branch
            %486 = sbr.rel (%p484) target = $region56
          $region55: #{swiglu_ffn.1} parent=51 // pred_region
            // Predicated region
            $region57: #{swiglu_ffn.1} parent=55 // pred_check
              _
            $region58: #{swiglu_ffn.1} parent=55 // pred_check_branch
              %488 = sbr.rel (0) target = $region60
            $region59: #{swiglu_ffn.1} parent=55 // pred_region
              // Predicated region
              $region79: #{swiglu_ffn.1} parent=59 // pred_check
                _
              $region80: #{swiglu_ffn.1} parent=59 // pred_check_branch
                %540 = sbr.rel (0) target = $region82
              $region81: #{swiglu_ffn.1} parent=59 // pred_region
                %s541 = sshrl.u32 %s479, 1
                // While loop
                $region83: #{swiglu_ffn.1} parent=81 // loop_pre_header
                  _
                $region84: #{swiglu_ffn.1} parent=81 // loop_header
                  %s543 = sphi 0, %s545
                  %p544 = scmp.ge.s32.totalorder %s543, %s541
                  %s548 = sphi 0, %s557
                  %s549 = sphi %s472, %s560
                  %s550 = sphi %s483, %s561
                $region85: #{swiglu_ffn.1} parent=81 // loop_header_branch
                  %547 = sbr.rel (%p544) target = $region89
                $region86: #{swiglu_ffn.1} parent=81 // loop_body
                  %v551 = vld [vmem:[%s549] sm:$0xff]
                  %552 = vst [vmem:[%s550] sm:$0xff] %v551
                  %v553 = vld [vmem:[%s549 + $0x8] sm:$0xff]
                  %554 = vst [vmem:[%s550 + $0x8] sm:$0xff] %v553
                  %s555 = sadd.s32 1, %s548
                  %p556 = scmp.ge.s32.totalorder %s555, %s541
                  %s557 = scalar_select %p556, 0, %s555
                  %s558 = smul.u32 %s557, 16
                  %s559 = smul.u32 %s557, 16
                  %s560 = scalar_lea.vmem %s472, %s558 [#allocation2]
                  %s561 = scalar_lea.vmem %s483, %s559
                $region87: #{swiglu_ffn.1} parent=81 // loop_footer
                  %s545 = sadd.s32 %s543, 1
                $region88: #{swiglu_ffn.1} parent=81 // loop_footer_branch
                  %542 = sbr.rel target = $region84
                $region89: #{swiglu_ffn.1} parent=81 // loop_exit
                  _
                %s562 = sshrl.u32 %s479, 1
                %s563 = sand.u32 %s479, 1
                %s564 = smul.u32 %s562, 2
                %s565 = smul.u32 8, %s564
                %s566 = scalar_lea.vmem %s472, %s565 [#allocation2]
                %s567 = smul.u32 8, %s564
                %s568 = scalar_lea.vmem %s483, %s567
                // While loop
                $region90: #{swiglu_ffn.1} parent=81 // loop_pre_header
                  _
                $region91: #{swiglu_ffn.1} parent=81 // loop_header
                  %s570 = sphi 0, %s572
                  %p571 = scmp.ge.s32.totalorder %s570, %s563
                  %s575 = sphi 0, %s582
                  %s576 = sphi %s566, %s585
                  %s577 = sphi %s568, %s586
                $region92: #{swiglu_ffn.1} parent=81 // loop_header_branch
                  %574 = sbr.rel (%p571) target = $region96
                $region93: #{swiglu_ffn.1} parent=81 // loop_body
                  %v578 = vld [vmem:[%s576] sm:$0xff]
                  %579 = vst [vmem:[%s577] sm:$0xff] %v578
                  %s580 = sadd.s32 1, %s575
                  %p581 = scmp.ge.s32.totalorder %s580, %s563
                  %s582 = scalar_select %p581, 0, %s580
                  %s583 = smul.u32 %s582, 8
                  %s584 = smul.u32 %s582, 8
                  %s585 = scalar_lea.vmem %s566, %s583 [#allocation2]
                  %s586 = scalar_lea.vmem %s568, %s584
                $region94: #{swiglu_ffn.1} parent=81 // loop_footer
                  %s572 = sadd.s32 %s570, 1
                $region95: #{swiglu_ffn.1} parent=81 // loop_footer_branch
                  %569 = sbr.rel target = $region91
                $region96: #{swiglu_ffn.1} parent=81 // loop_exit
                  _
              $region82: #{swiglu_ffn.1} parent=59 // pred_fallthru
                _
              // Predicated region
              $region97: #{swiglu_ffn.1} parent=59 // pred_check
                _
              $region98: #{swiglu_ffn.1} parent=59 // pred_check_branch
                %588 = sbr.rel target = $region100
              $region99: #{swiglu_ffn.1} parent=59 // pred_region
                _
              $region100: #{swiglu_ffn.1} parent=59 // pred_fallthru
                _
            $region60: #{swiglu_ffn.1} parent=55 // pred_fallthru
              _
            // Predicated region
            $region61: #{swiglu_ffn.1} parent=55 // pred_check
              _
            $region62: #{swiglu_ffn.1} parent=55 // pred_check_branch
              %490 = sbr.rel target = $region64
            $region63: #{swiglu_ffn.1} parent=55 // pred_region
              %s492 = ssub.s32 256, 1
              %s493 = sshrl.u32 %s479, 1
              // While loop
              $region65: #{swiglu_ffn.1} parent=63 // loop_pre_header
                _
              $region66: #{swiglu_ffn.1} parent=63 // loop_header
                %s495 = sphi 0, %s497
                %p496 = scmp.ge.s32.totalorder %s495, %s493
                %s500 = sphi 0, %s509
                %s501 = sphi %s472, %s512
                %s502 = sphi %s483, %s513
              $region67: #{swiglu_ffn.1} parent=63 // loop_header_branch
                %499 = sbr.rel (%p496) target = $region71
              $region68: #{swiglu_ffn.1} parent=63 // loop_body
                %v503 = vld [vmem:[%s501] sm:%s492]
                %504 = vst [vmem:[%s502] sm:%s492] %v503
                %v505 = vld [vmem:[%s501 + $0x8] sm:%s492]
                %506 = vst [vmem:[%s502 + $0x8] sm:%s492] %v505
                %s507 = sadd.s32 1, %s500
                %p508 = scmp.ge.s32.totalorder %s507, %s493
                %s509 = scalar_select %p508, 0, %s507
                %s510 = smul.u32 %s509, 16
                %s511 = smul.u32 %s509, 16
                %s512 = scalar_lea.vmem %s472, %s510 [#allocation2]
                %s513 = scalar_lea.vmem %s483, %s511
              $region69: #{swiglu_ffn.1} parent=63 // loop_footer
                %s497 = sadd.s32 %s495, 1
              $region70: #{swiglu_ffn.1} parent=63 // loop_footer_branch
                %494 = sbr.rel target = $region66
              $region71: #{swiglu_ffn.1} parent=63 // loop_exit
                _
              %s514 = sshrl.u32 %s479, 1
              %s515 = sand.u32 %s479, 1
              %s516 = smul.u32 %s514, 2
              %s517 = smul.u32 8, %s516
              %s518 = scalar_lea.vmem %s472, %s517 [#allocation2]
              %s519 = smul.u32 8, %s516
              %s520 = scalar_lea.vmem %s483, %s519
              // While loop
              $region72: #{swiglu_ffn.1} parent=63 // loop_pre_header
                _
              $region73: #{swiglu_ffn.1} parent=63 // loop_header
                %s522 = sphi 0, %s524
                %p523 = scmp.ge.s32.totalorder %s522, %s515
                %s527 = sphi 0, %s534
                %s528 = sphi %s518, %s537
                %s529 = sphi %s520, %s538
              $region74: #{swiglu_ffn.1} parent=63 // loop_header_branch
                %526 = sbr.rel (%p523) target = $region78
              $region75: #{swiglu_ffn.1} parent=63 // loop_body
                %v530 = vld [vmem:[%s528] sm:%s492]
                %531 = vst [vmem:[%s529] sm:%s492] %v530
                %s532 = sadd.s32 1, %s527
                %p533 = scmp.ge.s32.totalorder %s532, %s515
                %s534 = scalar_select %p533, 0, %s532
                %s535 = smul.u32 %s534, 8
                %s536 = smul.u32 %s534, 8
                %s537 = scalar_lea.vmem %s518, %s535 [#allocation2]
                %s538 = scalar_lea.vmem %s520, %s536
              $region76: #{swiglu_ffn.1} parent=63 // loop_footer
                %s524 = sadd.s32 %s522, 1
              $region77: #{swiglu_ffn.1} parent=63 // loop_footer_branch
                %521 = sbr.rel target = $region73
              $region78: #{swiglu_ffn.1} parent=63 // loop_exit
                _
            $region64: #{swiglu_ffn.1} parent=55 // pred_fallthru
              _
          $region56: #{swiglu_ffn.1} parent=51 // pred_fallthru
            _
          %589 = vnop
        $region52: #{swiglu_ffn.1} parent=47 // pred_fallthru
          _
      $region48: #{swiglu_ffn.1} parent=5 // pred_fallthru
        _
      %p590 = scmp.le.s32.totalorder 2, %s13
      // Predicated region
      $region101: #{swiglu_ffn.1} parent=5 // pred_check
        %p591 = pneg %p590
      $region102: #{swiglu_ffn.1} parent=5 // pred_check_branch
        %593 = sbr.rel (%p591) target = $region104
      $region103: #{swiglu_ffn.1} parent=5 // pred_region
        %s594 = ssub.s32 %s13, 2
        // Predicated region
        $region105: #{swiglu_ffn.1} parent=103 // pred_check
          %p595 = pneg %p194
        $region106: #{swiglu_ffn.1} parent=103 // pred_check_branch
          %597 = sbr.rel (%p595) target = $region108
        $region107: #{swiglu_ffn.1} parent=103 // pred_region
          %s598 = sand.u32 %s179, 1
          %s599 = sand.u32 %s179, 1
          %s600 = smul.addr %s599, 16
          %s601 = scalar_lea.vmem [#allocation2], %s600
        $region108: #{swiglu_ffn.1} parent=103 // pred_fallthru
          _
      $region104: #{swiglu_ffn.1} parent=5 // pred_fallthru
        _
    $region6: #{swiglu_ffn.1} parent=1 // loop_footer
      %s17 = sadd.s32 1, %s13
    $region7: #{swiglu_ffn.1} parent=1 // loop_footer_branch
      %12 = sbr.rel target = $region3
    $region8: #{swiglu_ffn.1} parent=1 // loop_exit
      _

</llo_original>
